<compile_context>
chip_gen: v7x
topology: tpu7x:2x2x1
jax: 0.10.0
libtpu: 0.0.40
codegen_flags: <defaults>
</compile_context>

<pallas_src>
import functools

import jax
import jax.numpy as jnp
from jax.experimental import pallas as pl
from jax.experimental.pallas import tpu as pltpu

EPS = 1e-5  # PyTorch GroupNorm default eps


def _cross_attn_kernel(x_ref, ycol_ref, ahw_ref, ehw_ref, bd1_ref, bd3_ref,
                       bsum_ref, selt_ref, aux_ref, o_ref, *, h, hpw, cg, bb):
    # x_ref    : (R, S)        R = bb*cg rows (batch-major, channel-minor), S = h*w
    # ycol_ref : (R9, S)       R9 = bb*9*Cg im2col'd camera rows
    # ahw_ref  : (S, h+w)      averaging matrix (pool_h | pool_w)
    # ehw_ref  : (h+w, S)      0/1 expansion matrix (inverse broadcast of ahw)
    # bd1_ref  : (R, R)        block-diag conv1x1 weight (bb copies of w1)
    # bd3_ref  : (R, R9)       block-diag conv3x3 weight (bb copies of w3 flat)
    # bsum_ref : (bb, R)       0/1 segment-sum matrix (rows of one (batch,group))
    # selt_ref : (cg, R)       0/1 channel selector, transposed
    # aux_ref  : (R, cg+4+bb)  [SelMat | b1 | gamma | beta | b3 | Erow]
    dot = functools.partial(jnp.dot, preferred_element_type=jnp.float32)

    x = x_ref[...]                                # (R, S)
    ahw = ahw_ref[...]
    ehw = ehw_ref[...]
    bd1 = bd1_ref[...]
    bsum = bsum_ref[...]
    selt = selt_ref[...]
    aux = aux_ref[...]

    selmat = aux[:, :cg]                          # (R, cg)
    b1 = aux[:, cg:cg + 1]                        # (R, 1)
    gamma = aux[:, cg + 1:cg + 2]
    beta = aux[:, cg + 2:cg + 3]
    b3 = aux[:, cg + 3:cg + 4]
    erow = aux[:, cg + 4:cg + 4 + bb]             # (R, bb)

    # ---- pool_h / pool_w for all rows at once (MXU) ----
    xhw = dot(x, ahw)                             # (R, h+w)

    # ---- conv1x1 across channels (block-diag weight) + bias ----
    hw2 = dot(bd1, xhw) + b1                      # (R, h+w)
    sig_hw = jax.nn.sigmoid(hw2)

    # expand the per-row / per-column gates back to the full (R, S) map via
    # 0/1 expansion matmuls (exact: each output picks exactly one source value)
    col = jax.lax.broadcasted_iota(jnp.int32, (1, hpw), 1)
    gate_h = dot(jnp.where(col < h, sig_hw, 0.0), ehw)    # (R, S)
    gate_w = dot(jnp.where(col >= h, sig_hw, 0.0), ehw)   # (R, S)
    pre = x * gate_h * gate_w

    # ---- GroupNorm(num_groups == num_channels): per-row norm over S ----
    mu = jnp.mean(pre, axis=1, keepdims=True)              # (R, 1)
    cen = pre - mu
    var = jnp.mean(cen * cen, axis=1, keepdims=True)       # (R, 1)
    x1 = gamma * (cen * jax.lax.rsqrt(var + EPS)) + beta   # (R, S)

    # ---- conv3x3 on camera features: one block-diag matmul on im2col'd y ----
    x2 = dot(bd3_ref[...], ycol_ref[...]) + b3             # (R, S)

    # ---- channel softmax of the global-average-pooled maps, per segment ----
    def seg_softmax(feat):
        m_row = jnp.mean(feat, axis=1, keepdims=True)      # (R, 1)
        m_bc = dot(bsum, m_row * selmat)                   # (bb, cg)
        m_bc = m_bc - jnp.max(m_bc, axis=1, keepdims=True)
        e = jnp.exp(m_bc)
        p = e / jnp.sum(e, axis=1, keepdims=True)          # (bb, cg)
        # scatter the probs into a (bb, R) row-weight matrix (block-diag rows)
        return bsum * dot(p, selt)                         # (bb, R)

    p1 = seg_softmax(x1)          # softmax(avg_pool(x1)) applied to x2
    p2 = seg_softmax(x2)          # softmax(avg_pool(x2)) applied to x1
    wmap = dot(p1, x2) + dot(p2, x1)                       # (bb, S)

    # broadcast the per-(batch,group) weight map back to rows and gate x
    o_ref[...] = x * dot(erow, jax.nn.sigmoid(wmap))       # (R, S)


def lidar_camera_cross_attention(x, y, w1, b1, gamma, beta, w3, b3, *, groups=8):
    b, c, h, w = x.shape
    B, C, H, W = y.shape
    assert c % groups == 0 and C % groups == 0
    assert H * W == h * w and b == B
    cg, Cg, bg = c // groups, C // groups, b * groups
    S = h * w
    f32 = jnp.float32

    # >=2 parallel grid steps keeps both v7x TensorCores busy; fall back to a
    # single step if the merged block would violate sublane (x8) divisibility.
    nb = 2 if (bg % 2 == 0 and bg >= 2) else 1
    bb = bg // nb
    if nb > 1 and ((bb * cg) % 8 or (bb * 9 * Cg) % 8):
        nb, bb = 1, bg
    R = bb * cg
    R9 = bb * 9 * Cg

    # ---- lane-dense inputs ----
    x_flat = x.reshape(bg * cg, S).astype(f32)

    # im2col the camera features: row = (batch, tap=ky*3+kx, channel)
    gy = y.reshape(bg, Cg, H, W).astype(f32)
    ypad = jnp.pad(gy, ((0, 0), (0, 0), (1, 1), (1, 1)))
    taps = [ypad[:, :, ky:ky + H, kx:kx + W] for ky in range(3) for kx in range(3)]
    ycol = jnp.stack(taps, axis=1).reshape(bg * 9 * Cg, S)

    # ---- constant matrices (resident in VMEM: constant index_map, grid=2) ----
    rows = jnp.arange(S)
    oh_i = jax.nn.one_hot(rows // w, h, dtype=f32)           # (S, h)
    oh_j = jax.nn.one_hot(rows % w, w, dtype=f32)            # (S, w)
    A_hw = jnp.concatenate([oh_i / w, oh_j / h], axis=1)     # (S, h+w) averaging
    E_hw = jnp.concatenate([oh_i, oh_j], axis=1).T           # (h+w, S) expansion

    eye_bb = jnp.eye(bb, dtype=f32)
    BD1 = jnp.kron(eye_bb, w1.astype(f32))                   # (R, R)
    W3f = jnp.transpose(w3, (0, 2, 3, 1)).reshape(cg, 9 * Cg).astype(f32)
    BD3 = jnp.kron(eye_bb, W3f)                              # (R, R9)

    r_idx = jnp.arange(R)
    Bsum = jax.nn.one_hot(r_idx // cg, bb, dtype=f32).T      # (bb, R)
    SelT = jax.nn.one_hot(r_idx % cg, cg, dtype=f32).T       # (cg, R)
    SelMat = SelT.T                                          # (R, cg)
    Erow = Bsum.T                                            # (R, bb)
    params = jnp.tile(jnp.stack([b1, gamma, beta, b3], axis=1).astype(f32),
                      (bb, 1))                               # (R, 4)
    aux = jnp.concatenate([SelMat, params, Erow], axis=1)    # (R, cg+4+bb)

    kernel = functools.partial(_cross_attn_kernel, h=h, hpw=h + w, cg=cg, bb=bb)

    out_flat = pl.pallas_call(
        kernel,
        out_shape=jax.ShapeDtypeStruct((bg * cg, S), f32),
        grid=(nb,),
        in_specs=[
            pl.BlockSpec((R, S), lambda i: (i, 0)),           # x (blocked)
            pl.BlockSpec((R9, S), lambda i: (i, 0)),          # im2col y (blocked)
            pl.BlockSpec((S, h + w), lambda i: (0, 0)),       # A_hw
            pl.BlockSpec((h + w, S), lambda i: (0, 0)),       # E_hw
            pl.BlockSpec((R, R), lambda i: (0, 0)),           # BD1
            pl.BlockSpec((R, R9), lambda i: (0, 0)),          # BD3
            pl.BlockSpec((bb, R), lambda i: (0, 0)),          # Bsum
            pl.BlockSpec((cg, R), lambda i: (0, 0)),          # SelT
            pl.BlockSpec((R, cg + 4 + bb), lambda i: (0, 0)), # packed aux/params
        ],
        out_specs=pl.BlockSpec((R, S), lambda i: (i, 0)),
        compiler_params=pltpu.CompilerParams(
            dimension_semantics=("parallel",)),
    )(x_flat, ycol, A_hw, E_hw, BD1, BD3, Bsum, SelT, aux)
    return out_flat.reshape(b, c, h, w).astype(x.dtype)


def _reference(x, y, w1, b1, gamma, beta, w3, b3, *, groups=8):
    """Pure-JAX reimplementation of the PyTorch forward, for verification."""
    b, c, h, w = x.shape
    B, C, H, W = y.shape
    cg, Cg, bg = c // groups, C // groups, b * groups
    gx = x.reshape(bg, cg, h, w)
    gy = y.reshape(B * groups, Cg, H, W)

    xh = jnp.mean(gx, axis=3, keepdims=True)                     # (bg,cg,h,1)
    xw = jnp.transpose(jnp.mean(gx, axis=2, keepdims=True), (0, 1, 3, 2))  # (bg,cg,w,1)
    cat = jnp.concatenate([xh, xw], axis=2)                      # (bg,cg,h+w,1)
    hw = jnp.einsum('oi,bils->bols', w1, cat) + b1.reshape(1, cg, 1, 1)
    xh2, xw2 = hw[:, :, :h], hw[:, :, h:]
    pre = gx * jax.nn.sigmoid(xh2) * jax.nn.sigmoid(jnp.transpose(xw2, (0, 1, 3, 2)))

    mu = jnp.mean(pre, axis=(2, 3), keepdims=True)
    var = jnp.mean((pre - mu) ** 2, axis=(2, 3), keepdims=True)
    x1 = (pre - mu) / jnp.sqrt(var + EPS) * gamma.reshape(1, cg, 1, 1) \
        + beta.reshape(1, cg, 1, 1)

    x2 = jax.lax.conv_general_dilated(
        gy, w3, (1, 1), 'SAME',
        dimension_numbers=('NCHW', 'OIHW', 'NCHW')) + b3.reshape(1, cg, 1, 1)

    x11 = jax.nn.softmax(jnp.mean(x1, axis=(2, 3)), axis=-1)     # (bg, cg)
    x21 = jax.nn.softmax(jnp.mean(x2, axis=(2, 3)), axis=-1)     # (bg, cg)
    x12 = x2.reshape(bg, cg, H * W)
    x22 = x1.reshape(bg, cg, h * w)
    weights = (jnp.einsum('bc,bcs->bs', x11, x12)
               + jnp.einsum('bc,bcs->bs', x21, x22)).reshape(bg, 1, h, w)
    return (gx * jax.nn.sigmoid(weights)).reshape(b, c, h, w)


if __name__ == "__main__":
    b, channels1, channels2, h, w, factor = 2, 32, 32, 16, 16, 8
    cg, Cg = channels1 // factor, channels2 // factor

    key = jax.random.PRNGKey(0)
    ks = jax.random.split(key, 8)
    x = jax.random.normal(ks[0], (b, channels1, h, w), jnp.float32)
    y = jax.random.normal(ks[1], (b, channels2, h, w), jnp.float32)

    # Deterministic synthetic parameters (shapes follow the module's __init__).
    w1 = 0.3 * jax.random.normal(ks[2], (cg, cg), jnp.float32)        # conv1x1 weight
    b1 = 0.1 * jax.random.normal(ks[3], (cg,), jnp.float32)           # conv1x1 bias
    gamma = 1.0 + 0.1 * jax.random.normal(ks[4], (cg,), jnp.float32)  # GroupNorm weight
    beta = 0.1 * jax.random.normal(ks[5], (cg,), jnp.float32)         # GroupNorm bias
    w3 = 0.2 * jax.random.normal(ks[6], (cg, Cg, 3, 3), jnp.float32)  # conv3x3 weight
    b3 = 0.1 * jax.random.normal(ks[7], (cg,), jnp.float32)           # conv3x3 bias

    out = lidar_camera_cross_attention(x, y, w1, b1, gamma, beta, w3, b3,
                                       groups=factor)
    out = jax.block_until_ready(out)

    ref = _reference(x, y, w1, b1, gamma, beta, w3, b3, groups=factor)
    assert out.shape == (b, channels1, h, w)
    err = float(jnp.max(jnp.abs(out - ref)))
    assert jnp.allclose(out, ref, atol=2e-4, rtol=2e-4), err
    print("KERNEL_OK")
</pallas_src>

<mosaic_0001>
module attributes {stable_mosaic.version = 11 : i64} {
  func.func @_cross_attn_kernel(%arg0: i32, %arg1: memref<32x256xf32, #tpu.memory_space<vmem>>, %arg2: memref<288x256xf32, #tpu.memory_space<vmem>>, %arg3: memref<256x32xf32, #tpu.memory_space<vmem>>, %arg4: memref<32x256xf32, #tpu.memory_space<vmem>>, %arg5: memref<32x32xf32, #tpu.memory_space<vmem>>, %arg6: memref<32x288xf32, #tpu.memory_space<vmem>>, %arg7: memref<8x32xf32, #tpu.memory_space<vmem>>, %arg8: memref<4x32xf32, #tpu.memory_space<vmem>>, %arg9: memref<32x16xf32, #tpu.memory_space<vmem>>, %arg10: memref<32x256xf32, #tpu.memory_space<vmem>>) attributes {dimension_semantics = [#tpu.dimension_semantics<parallel>], iteration_bounds = array<i64: 2>, scalar_prefetch = 0 : i64, scratch_operands = 0 : i64, tpu.core_type = #tpu.core_type<tc>, window_params = [{transform_indices = @transform_0, window_bounds = array<i64: 32, 256>}, {transform_indices = @transform_1, window_bounds = array<i64: 288, 256>}, {pipeline_mode = #tpu.pipeline_mode<synchronous>, transform_indices = @transform_2, window_bounds = array<i64: 256, 32>}, {pipeline_mode = #tpu.pipeline_mode<synchronous>, transform_indices = @transform_3, window_bounds = array<i64: 32, 256>}, {pipeline_mode = #tpu.pipeline_mode<synchronous>, transform_indices = @transform_4, window_bounds = array<i64: 32, 32>}, {pipeline_mode = #tpu.pipeline_mode<synchronous>, transform_indices = @transform_5, window_bounds = array<i64: 32, 288>}, {pipeline_mode = #tpu.pipeline_mode<synchronous>, transform_indices = @transform_6, window_bounds = array<i64: 8, 32>}, {pipeline_mode = #tpu.pipeline_mode<synchronous>, transform_indices = @transform_7, window_bounds = array<i64: 4, 32>}, {pipeline_mode = #tpu.pipeline_mode<synchronous>, transform_indices = @transform_8, window_bounds = array<i64: 32, 16>}, {transform_indices = @transform_9, window_bounds = array<i64: 32, 256>}]} {
    %c0 = arith.constant 0 : index
    %c0_0 = arith.constant 0 : index
    %0 = vector.load %arg1[%c0, %c0_0] : memref<32x256xf32, #tpu.memory_space<vmem>>, vector<32x256xf32>
    %c0_1 = arith.constant 0 : index
    %c0_2 = arith.constant 0 : index
    %1 = vector.load %arg3[%c0_1, %c0_2] : memref<256x32xf32, #tpu.memory_space<vmem>>, vector<256x32xf32>
    %c0_3 = arith.constant 0 : index
    %c0_4 = arith.constant 0 : index
    %2 = vector.load %arg4[%c0_3, %c0_4] : memref<32x256xf32, #tpu.memory_space<vmem>>, vector<32x256xf32>
    %c0_5 = arith.constant 0 : index
    %c0_6 = arith.constant 0 : index
    %3 = vector.load %arg5[%c0_5, %c0_6] : memref<32x32xf32, #tpu.memory_space<vmem>>, vector<32x32xf32>
    %c0_7 = arith.constant 0 : index
    %c0_8 = arith.constant 0 : index
    %4 = vector.load %arg7[%c0_7, %c0_8] : memref<8x32xf32, #tpu.memory_space<vmem>>, vector<8x32xf32>
    %c0_9 = arith.constant 0 : index
    %c0_10 = arith.constant 0 : index
    %5 = vector.load %arg8[%c0_9, %c0_10] : memref<4x32xf32, #tpu.memory_space<vmem>>, vector<4x32xf32>
    %c0_11 = arith.constant 0 : index
    %c0_12 = arith.constant 0 : index
    %6 = vector.load %arg9[%c0_11, %c0_12] : memref<32x16xf32, #tpu.memory_space<vmem>>, vector<32x16xf32>
    %7 = vector.extract_strided_slice %6 {offsets = [0, 0], sizes = [32, 4], strides = [1, 1]} : vector<32x16xf32> to vector<32x4xf32>
    %8 = vector.extract_strided_slice %6 {offsets = [0, 4], sizes = [32, 1], strides = [1, 1]} : vector<32x16xf32> to vector<32x1xf32>
    %9 = vector.extract_strided_slice %6 {offsets = [0, 5], sizes = [32, 1], strides = [1, 1]} : vector<32x16xf32> to vector<32x1xf32>
    %10 = vector.extract_strided_slice %6 {offsets = [0, 6], sizes = [32, 1], strides = [1, 1]} : vector<32x16xf32> to vector<32x1xf32>
    %11 = vector.extract_strided_slice %6 {offsets = [0, 7], sizes = [32, 1], strides = [1, 1]} : vector<32x16xf32> to vector<32x1xf32>
    %12 = vector.extract_strided_slice %6 {offsets = [0, 8], sizes = [32, 8], strides = [1, 1]} : vector<32x16xf32> to vector<32x8xf32>
    %cst = arith.constant dense<0.000000e+00> : vector<32x32xf32>
    %13 = tpu.matmul %0, %1, %cst {dimension_numbers = #tpu.dot_dimension_numbers<[1], [0], [0], [1], [0, 0, 1, 1], [], []>} : vector<32x256xf32>, vector<256x32xf32>, vector<32x32xf32> -> vector<32x32xf32>
    %cst_13 = arith.constant dense<0.000000e+00> : vector<32x32xf32>
    %14 = tpu.matmul %3, %13, %cst_13 {dimension_numbers = #tpu.dot_dimension_numbers<[1], [0], [0], [1], [0, 0, 1, 1], [], []>} : vector<32x32xf32>, vector<32x32xf32>, vector<32x32xf32> -> vector<32x32xf32>
    %15 = vector.broadcast %8 : vector<32x1xf32> to vector<32x32xf32>
    %16 = arith.addf %14, %15 : vector<32x32xf32>
    %17 = arith.negf %16 : vector<32x32xf32>
    %18 = math.exp %17 : vector<32x32xf32>
    %cst_14 = arith.constant 1.000000e+00 : f32
    %19 = vector.broadcast %cst_14 : f32 to vector<32x32xf32>
    %20 = arith.addf %19, %18 : vector<32x32xf32>
    %21 = arith.divf %19, %20 : vector<32x32xf32>
    %22 = tpu.iota {dimensions = array<i32: 1>} : vector<1x32xi32>
    %c16_i32 = arith.constant 16 : i32
    %23 = vector.broadcast %c16_i32 : i32 to vector<1x32xi32>
    %24 = arith.cmpi slt, %22, %23 : vector<1x32xi32>
    %cst_15 = arith.constant 0.000000e+00 : f32
    %25 = vector.shape_cast %24 : vector<1x32xi1> to vector<1x32xi1>
    %26 = vector.broadcast %25 : vector<1x32xi1> to vector<32x32xi1>
    %27 = vector.broadcast %cst_15 : f32 to vector<32x32xf32>
    %28 = arith.select %26, %21, %27 : vector<32x32xi1>, vector<32x32xf32>
    %cst_16 = arith.constant dense<0.000000e+00> : vector<32x256xf32>
    %29 = tpu.matmul %28, %2, %cst_16 {dimension_numbers = #tpu.dot_dimension_numbers<[1], [0], [0], [1], [0, 0, 1, 1], [], []>} : vector<32x32xf32>, vector<32x256xf32>, vector<32x256xf32> -> vector<32x256xf32>
    %c16_i32_17 = arith.constant 16 : i32
    %30 = vector.broadcast %c16_i32_17 : i32 to vector<1x32xi32>
    %31 = arith.cmpi sge, %22, %30 : vector<1x32xi32>
    %cst_18 = arith.constant 0.000000e+00 : f32
    %32 = vector.shape_cast %31 : vector<1x32xi1> to vector<1x32xi1>
    %33 = vector.broadcast %32 : vector<1x32xi1> to vector<32x32xi1>
    %34 = vector.broadcast %cst_18 : f32 to vector<32x32xf32>
    %35 = arith.select %33, %21, %34 : vector<32x32xi1>, vector<32x32xf32>
    %cst_19 = arith.constant dense<0.000000e+00> : vector<32x256xf32>
    %36 = tpu.matmul %35, %2, %cst_19 {dimension_numbers = #tpu.dot_dimension_numbers<[1], [0], [0], [1], [0, 0, 1, 1], [], []>} : vector<32x32xf32>, vector<32x256xf32>, vector<32x256xf32> -> vector<32x256xf32>
    %37 = arith.mulf %0, %29 : vector<32x256xf32>
    %38 = arith.mulf %37, %36 : vector<32x256xf32>
    %cst_20 = arith.constant dense<0.000000e+00> : vector<32xf32>
    %39 = vector.multi_reduction <add>, %38, %cst_20 [1] : vector<32x256xf32> to vector<32xf32>
    %40 = vector.shape_cast %39 : vector<32xf32> to vector<32x1xf32>
    %cst_21 = arith.constant 2.560000e+02 : f32
    %41 = vector.broadcast %cst_21 : f32 to vector<32x1xf32>
    %42 = arith.divf %40, %41 : vector<32x1xf32>
    %43 = vector.broadcast %42 : vector<32x1xf32> to vector<32x256xf32>
    %44 = arith.subf %38, %43 : vector<32x256xf32>
    %45 = arith.mulf %44, %44 : vector<32x256xf32>
    %cst_22 = arith.constant dense<0.000000e+00> : vector<32xf32>
    %46 = vector.multi_reduction <add>, %45, %cst_22 [1] : vector<32x256xf32> to vector<32xf32>
    %47 = vector.shape_cast %46 : vector<32xf32> to vector<32x1xf32>
    %cst_23 = arith.constant 2.560000e+02 : f32
    %48 = vector.broadcast %cst_23 : f32 to vector<32x1xf32>
    %49 = arith.divf %47, %48 : vector<32x1xf32>
    %cst_24 = arith.constant 9.99999974E-6 : f32
    %50 = vector.broadcast %cst_24 : f32 to vector<32x1xf32>
    %51 = arith.addf %49, %50 : vector<32x1xf32>
    %52 = math.rsqrt %51 : vector<32x1xf32>
    %53 = vector.broadcast %52 : vector<32x1xf32> to vector<32x256xf32>
    %54 = arith.mulf %44, %53 : vector<32x256xf32>
    %55 = vector.broadcast %9 : vector<32x1xf32> to vector<32x256xf32>
    %56 = arith.mulf %55, %54 : vector<32x256xf32>
    %57 = vector.broadcast %10 : vector<32x1xf32> to vector<32x256xf32>
    %58 = arith.addf %56, %57 : vector<32x256xf32>
    %c0_25 = arith.constant 0 : index
    %c0_26 = arith.constant 0 : index
    %59 = vector.load %arg6[%c0_25, %c0_26] : memref<32x288xf32, #tpu.memory_space<vmem>>, vector<32x288xf32>
    %c0_27 = arith.constant 0 : index
    %c0_28 = arith.constant 0 : index
    %60 = vector.load %arg2[%c0_27, %c0_28] : memref<288x256xf32, #tpu.memory_space<vmem>>, vector<288x256xf32>
    %cst_29 = arith.constant dense<0.000000e+00> : vector<32x256xf32>
    %61 = tpu.matmul %59, %60, %cst_29 {dimension_numbers = #tpu.dot_dimension_numbers<[1], [0], [0], [1], [0, 0, 1, 1], [], []>} : vector<32x288xf32>, vector<288x256xf32>, vector<32x256xf32> -> vector<32x256xf32>
    %62 = vector.broadcast %11 : vector<32x1xf32> to vector<32x256xf32>
    %63 = arith.addf %61, %62 : vector<32x256xf32>
    %cst_30 = arith.constant dense<0.000000e+00> : vector<32xf32>
    %64 = vector.multi_reduction <add>, %58, %cst_30 [1] : vector<32x256xf32> to vector<32xf32>
    %65 = vector.shape_cast %64 : vector<32xf32> to vector<32x1xf32>
    %cst_31 = arith.constant 2.560000e+02 : f32
    %66 = vector.broadcast %cst_31 : f32 to vector<32x1xf32>
    %67 = arith.divf %65, %66 : vector<32x1xf32>
    %68 = vector.broadcast %67 : vector<32x1xf32> to vector<32x4xf32>
    %69 = arith.mulf %68, %7 : vector<32x4xf32>
    %cst_32 = arith.constant dense<0.000000e+00> : vector<8x4xf32>
    %70 = tpu.matmul %4, %69, %cst_32 {dimension_numbers = #tpu.dot_dimension_numbers<[1], [0], [0], [1], [0, 0, 1, 1], [], []>} : vector<8x32xf32>, vector<32x4xf32>, vector<8x4xf32> -> vector<8x4xf32>
    %cst_33 = arith.constant dense<0xFF800000> : vector<8xf32>
    %71 = vector.multi_reduction <maximumf>, %70, %cst_33 [1] : vector<8x4xf32> to vector<8xf32>
    %72 = vector.shape_cast %71 : vector<8xf32> to vector<8x1xf32>
    %73 = vector.broadcast %72 : vector<8x1xf32> to vector<8x4xf32>
    %74 = arith.subf %70, %73 : vector<8x4xf32>
    %75 = math.exp %74 : vector<8x4xf32>
    %cst_34 = arith.constant dense<0.000000e+00> : vector<8xf32>
    %76 = vector.multi_reduction <add>, %75, %cst_34 [1] : vector<8x4xf32> to vector<8xf32>
    %77 = vector.shape_cast %76 : vector<8xf32> to vector<8x1xf32>
    %78 = vector.broadcast %77 : vector<8x1xf32> to vector<8x4xf32>
    %79 = arith.divf %75, %78 : vector<8x4xf32>
    %cst_35 = arith.constant dense<0.000000e+00> : vector<8x32xf32>
    %80 = tpu.matmul %79, %5, %cst_35 {dimension_numbers = #tpu.dot_dimension_numbers<[1], [0], [0], [1], [0, 0, 1, 1], [], []>} : vector<8x4xf32>, vector<4x32xf32>, vector<8x32xf32> -> vector<8x32xf32>
    %81 = arith.mulf %4, %80 : vector<8x32xf32>
    %cst_36 = arith.constant dense<0.000000e+00> : vector<32xf32>
    %82 = vector.multi_reduction <add>, %63, %cst_36 [1] : vector<32x256xf32> to vector<32xf32>
    %83 = vector.shape_cast %82 : vector<32xf32> to vector<32x1xf32>
    %cst_37 = arith.constant 2.560000e+02 : f32
    %84 = vector.broadcast %cst_37 : f32 to vector<32x1xf32>
    %85 = arith.divf %83, %84 : vector<32x1xf32>
    %86 = vector.broadcast %85 : vector<32x1xf32> to vector<32x4xf32>
    %87 = arith.mulf %86, %7 : vector<32x4xf32>
    %cst_38 = arith.constant dense<0.000000e+00> : vector<8x4xf32>
    %88 = tpu.matmul %4, %87, %cst_38 {dimension_numbers = #tpu.dot_dimension_numbers<[1], [0], [0], [1], [0, 0, 1, 1], [], []>} : vector<8x32xf32>, vector<32x4xf32>, vector<8x4xf32> -> vector<8x4xf32>
    %cst_39 = arith.constant dense<0xFF800000> : vector<8xf32>
    %89 = vector.multi_reduction <maximumf>, %88, %cst_39 [1] : vector<8x4xf32> to vector<8xf32>
    %90 = vector.shape_cast %89 : vector<8xf32> to vector<8x1xf32>
    %91 = vector.broadcast %90 : vector<8x1xf32> to vector<8x4xf32>
    %92 = arith.subf %88, %91 : vector<8x4xf32>
    %93 = math.exp %92 : vector<8x4xf32>
    %cst_40 = arith.constant dense<0.000000e+00> : vector<8xf32>
    %94 = vector.multi_reduction <add>, %93, %cst_40 [1] : vector<8x4xf32> to vector<8xf32>
    %95 = vector.shape_cast %94 : vector<8xf32> to vector<8x1xf32>
    %96 = vector.broadcast %95 : vector<8x1xf32> to vector<8x4xf32>
    %97 = arith.divf %93, %96 : vector<8x4xf32>
    %cst_41 = arith.constant dense<0.000000e+00> : vector<8x32xf32>
    %98 = tpu.matmul %97, %5, %cst_41 {dimension_numbers = #tpu.dot_dimension_numbers<[1], [0], [0], [1], [0, 0, 1, 1], [], []>} : vector<8x4xf32>, vector<4x32xf32>, vector<8x32xf32> -> vector<8x32xf32>
    %99 = arith.mulf %4, %98 : vector<8x32xf32>
    %cst_42 = arith.constant dense<0.000000e+00> : vector<8x256xf32>
    %100 = tpu.matmul %81, %63, %cst_42 {dimension_numbers = #tpu.dot_dimension_numbers<[1], [0], [0], [1], [0, 0, 1, 1], [], []>} : vector<8x32xf32>, vector<32x256xf32>, vector<8x256xf32> -> vector<8x256xf32>
    %cst_43 = arith.constant dense<0.000000e+00> : vector<8x256xf32>
    %101 = tpu.matmul %99, %58, %cst_43 {dimension_numbers = #tpu.dot_dimension_numbers<[1], [0], [0], [1], [0, 0, 1, 1], [], []>} : vector<8x32xf32>, vector<32x256xf32>, vector<8x256xf32> -> vector<8x256xf32>
    %102 = arith.addf %100, %101 : vector<8x256xf32>
    %103 = arith.negf %102 : vector<8x256xf32>
    %104 = math.exp %103 : vector<8x256xf32>
    %cst_44 = arith.constant 1.000000e+00 : f32
    %105 = vector.broadcast %cst_44 : f32 to vector<8x256xf32>
    %106 = arith.addf %105, %104 : vector<8x256xf32>
    %107 = arith.divf %105, %106 : vector<8x256xf32>
    %cst_45 = arith.constant dense<0.000000e+00> : vector<32x256xf32>
    %108 = tpu.matmul %12, %107, %cst_45 {dimension_numbers = #tpu.dot_dimension_numbers<[1], [0], [0], [1], [0, 0, 1, 1], [], []>} : vector<32x8xf32>, vector<8x256xf32>, vector<32x256xf32> -> vector<32x256xf32>
    %109 = arith.mulf %0, %108 : vector<32x256xf32>
    %c0_46 = arith.constant 0 : index
    %c0_47 = arith.constant 0 : index
    %110 = vector.load %arg10[%c0_46, %c0_47] : memref<32x256xf32, #tpu.memory_space<vmem>>, vector<32x256xf32>
    tpu.vector_store %arg10[%c0_46, %c0_47], %109 {strides = array<i32>} : memref<32x256xf32, #tpu.memory_space<vmem>>, vector<32x256xf32>,
    return
  }
  func.func @transform_0(%arg0: i32) -> (i32, i32) {
    %c0_i32 = arith.constant 0 : i32
    %c0_i32_0 = arith.constant 0 : i32
    return %arg0, %c0_i32 : i32, i32
  }
  func.func @transform_1(%arg0: i32) -> (i32, i32) {
    %c0_i32 = arith.constant 0 : i32
    %c0_i32_0 = arith.constant 0 : i32
    return %arg0, %c0_i32 : i32, i32
  }
  func.func @transform_2(%arg0: i32) -> (i32, i32) {
    %c0_i32 = arith.constant 0 : i32
    %c0_i32_0 = arith.constant 0 : i32
    %c0_i32_1 = arith.constant 0 : i32
    return %c0_i32, %c0_i32_0 : i32, i32
  }
  func.func @transform_3(%arg0: i32) -> (i32, i32) {
    %c0_i32 = arith.constant 0 : i32
    %c0_i32_0 = arith.constant 0 : i32
    %c0_i32_1 = arith.constant 0 : i32
    return %c0_i32, %c0_i32_0 : i32, i32
  }
  func.func @transform_4(%arg0: i32) -> (i32, i32) {
    %c0_i32 = arith.constant 0 : i32
    %c0_i32_0 = arith.constant 0 : i32
    %c0_i32_1 = arith.constant 0 : i32
    return %c0_i32, %c0_i32_0 : i32, i32
  }
  func.func @transform_5(%arg0: i32) -> (i32, i32) {
    %c0_i32 = arith.constant 0 : i32
    %c0_i32_0 = arith.constant 0 : i32
    %c0_i32_1 = arith.constant 0 : i32
    return %c0_i32, %c0_i32_0 : i32, i32
  }
  func.func @transform_6(%arg0: i32) -> (i32, i32) {
    %c0_i32 = arith.constant 0 : i32
    %c0_i32_0 = arith.constant 0 : i32
    %c0_i32_1 = arith.constant 0 : i32
    return %c0_i32, %c0_i32_0 : i32, i32
  }
  func.func @transform_7(%arg0: i32) -> (i32, i32) {
    %c0_i32 = arith.constant 0 : i32
    %c0_i32_0 = arith.constant 0 : i32
    %c0_i32_1 = arith.constant 0 : i32
    return %c0_i32, %c0_i32_0 : i32, i32
  }
  func.func @transform_8(%arg0: i32) -> (i32, i32) {
    %c0_i32 = arith.constant 0 : i32
    %c0_i32_0 = arith.constant 0 : i32
    %c0_i32_1 = arith.constant 0 : i32
    return %c0_i32, %c0_i32_0 : i32, i32
  }
  func.func @transform_9(%arg0: i32) -> (i32, i32) {
    %c0_i32 = arith.constant 0 : i32
    %c0_i32_0 = arith.constant 0 : i32
    return %arg0, %c0_i32 : i32, i32
  }
}

</mosaic_0001>

<llo_original>
// kernel: tpu_custom_call.1
$region0: #{tpu_custom_call.1}
  #allocation0 [shape = 'u32[]', space=smem, size = 0x4, offset = 0x4, fixed_abs, tag = 'smem constant byte address 0x4 - core index']
  #allocation1 [shape = 'u32[144,128]{1,0:T(1,128)}', space=vmem, size = 0x12000, scoped, tag = 'internal scratch']
  %s0 = inlined_call_operand.vmem [shape: f32[64,256], index: 0, kind: input, shape index: {}]
  %s1 = inlined_call_operand.hbm [shape: f32[576,256], index: 1, kind: input, shape index: {}]
  %s2 = inlined_call_operand.vmem [shape: f32[256,32], index: 2, kind: input, shape index: {}]
  %s3 = inlined_call_operand.vmem [shape: f32[32,256], index: 3, kind: input, shape index: {}]
  %s4 = inlined_call_operand.vmem [shape: f32[32,32], index: 4, kind: input, shape index: {}]
  %s5 = inlined_call_operand.vmem [shape: f32[32,288], index: 5, kind: input, shape index: {}]
  %s6 = inlined_call_operand.vmem [shape: f32[8,32], index: 6, kind: input, shape index: {}]
  %s7 = inlined_call_operand.vmem [shape: f32[4,32], index: 7, kind: input, shape index: {}]
  %s8 = inlined_call_operand.vmem [shape: f32[32,16], index: 8, kind: input, shape index: {}]
  %s9 = inlined_call_operand.hbm [shape: f32[64,256], index: 9, kind: output, shape index: {}]
  %s10 = sld [smem:[#allocation0]]
  $region73: #{tpu_custom_call.1} parent=0
    _
  %s12 = ssub.s32 1, %s10
  %s13 = scalar_select 0, %s12, %s10
  $region1: #{tpu_custom_call.1} parent=0
    #allocation2 [shape = 'u8[589824]{0}', space=vmem, size = 0x90000, scoped, tag = 'input window, operand 1']
    #allocation3 [shape = 's32[2]{0}', space=sflag, size = 0x8, scoped, tag = 'scoped memory for tpu_custom_call.1']
    #allocation4 [shape = 's32[2]{0}', space=sflag, size = 0x8, scoped, tag = 'scoped memory for tpu_custom_call.1']
    #allocation5 [shape = 'u8[65536]{0}', space=vmem, size = 0x10000, scoped, tag = 'output window, operand 0']
    %14 = vsyncpa [#allocation3], 0
    %s15 = scalar_lea.sflag [#allocation3], 1
    %16 = vsyncpa %s15, 0
    %17 = vsyncpa [#allocation4], 0
    %s18 = scalar_lea.sflag [#allocation4], 1
    %19 = vsyncpa %s18, 0
    loop: start=0, step=1, limit=4
    $region2: #{tpu_custom_call.1} parent=1 // loop_pre_header
      _
    $region3: #{tpu_custom_call.1} parent=1 // loop_header
      %s21 = sphi 0, %s25
      %p22 = scmp.ge.s32.totalorder %s21, 4
      %s31 = sphi 0, %s33
      %s34 = sphi 0, %s31
      %s35 = sphi 0, %s34
      %s51 = sphi 0, %s35
      %s57 = sphi 0, %s59
      %s60 = sphi 0, %s57
      %s61 = sphi 0, %s60
      %s77 = sphi 0, %s61
      %s81 = sphi 0, %s81
      %s83 = sphi 0, %s81
      %s84 = sphi 0, %s83
      %s98 = sphi 0, %s84
      %s102 = sphi 0, %s102
      %s104 = sphi 0, %s102
      %s105 = sphi 0, %s104
      %s119 = sphi 0, %s105
      %s123 = sphi 0, %s123
      %s125 = sphi 0, %s123
      %s126 = sphi 0, %s125
      %s140 = sphi 0, %s126
      %s144 = sphi 0, %s144
      %s146 = sphi 0, %s144
      %s147 = sphi 0, %s146
      %s161 = sphi 0, %s147
      %s165 = sphi 0, %s165
      %s167 = sphi 0, %s165
      %s168 = sphi 0, %s167
      %s182 = sphi 0, %s168
      %s186 = sphi 0, %s186
      %s188 = sphi 0, %s186
      %s189 = sphi 0, %s188
      %s203 = sphi 0, %s189
      %s207 = sphi 0, %s207
      %s209 = sphi 0, %s207
      %s210 = sphi 0, %s209
      %s224 = sphi 0, %s210
      %s230 = sphi 0, %s232
      %s233 = sphi 0, %s230
      %s234 = sphi 0, %s233
      %s250 = sphi 0, %s234
    $region4: #{tpu_custom_call.1} parent=1 // loop_header_branch
      %24 = sbr.rel (%p22) target = $region8
    $region5: #{tpu_custom_call.1} parent=1 // loop_body
      %s26 = ssub.s32 %s21, 1
      %s27 = ssub.s32 %s21, 2
      %s28 = sadd.s32 %s21, 1
      %s29 = ssub.s32 %s21, %s28
      %p30 = scmp.eq.s32.totalorder %s29, 0
      %s32 = sadd.s32 %s31, 1
      %s33 = scalar_select %p30, %s31, %s32
      %p36 = pneg %p30
      %p37 = scmp.eq.s32.totalorder %s21, 1
      %p38 = por %p36, %p37
      %p39 = scmp.ne.s32.totalorder %s31, %s34
      %p40 = scmp.eq.s32.totalorder %s21, 0
      %p41 = por %p39, %p40
      %p42 = scmp.ne.s32.totalorder %s31, %s34
      %p43 = scmp.eq.s32.totalorder %s26, 1
      %p44 = por %p42, %p43
      %p45 = scmp.ne.s32.totalorder %s34, %s35
      %p46 = scmp.eq.s32.totalorder %s26, 0
      %p47 = por %p45, %p46
      %p48 = scmp.ne.s32.totalorder %s34, %s35
      %p49 = scmp.eq.s32.totalorder %s27, 1
      %p50 = por %p48, %p49
      %p52 = scmp.ne.s32.totalorder %s35, %s51
      %p53 = scmp.eq.s32.totalorder %s27, 0
      %p54 = por %p52, %p53
      %s55 = ssub.s32 %s21, %s28
      %p56 = scmp.eq.s32.totalorder %s55, 0
      %s58 = sadd.s32 %s57, 1
      %s59 = scalar_select %p56, %s57, %s58
      %p62 = pneg %p56
      %p63 = scmp.eq.s32.totalorder %s21, 1
      %p64 = por %p62, %p63
      %p65 = scmp.ne.s32.totalorder %s57, %s60
      %p66 = scmp.eq.s32.totalorder %s21, 0
      %p67 = por %p65, %p66
      %p68 = scmp.ne.s32.totalorder %s57, %s60
      %p69 = scmp.eq.s32.totalorder %s26, 1
      %p70 = por %p68, %p69
      %p71 = scmp.ne.s32.totalorder %s60, %s61
      %p72 = scmp.eq.s32.totalorder %s26, 0
      %p73 = por %p71, %p72
      %p74 = scmp.ne.s32.totalorder %s60, %s61
      %p75 = scmp.eq.s32.totalorder %s27, 1
      %p76 = por %p74, %p75
      %p78 = scmp.ne.s32.totalorder %s61, %s77
      %p79 = scmp.eq.s32.totalorder %s27, 0
      %p80 = por %p78, %p79
      %s82 = sadd.s32 %s81, 1
      %p85 = scmp.eq.s32.totalorder %s21, 1
      %p86 = scmp.ne.s32.totalorder %s81, %s83
      %p87 = scmp.eq.s32.totalorder %s21, 0
      %p88 = por %p86, %p87
      %p89 = scmp.ne.s32.totalorder %s81, %s83
      %p90 = scmp.eq.s32.totalorder %s26, 1
      %p91 = por %p89, %p90
      %p92 = scmp.ne.s32.totalorder %s83, %s84
      %p93 = scmp.eq.s32.totalorder %s26, 0
      %p94 = por %p92, %p93
      %p95 = scmp.ne.s32.totalorder %s83, %s84
      %p96 = scmp.eq.s32.totalorder %s27, 1
      %p97 = por %p95, %p96
      %p99 = scmp.ne.s32.totalorder %s84, %s98
      %p100 = scmp.eq.s32.totalorder %s27, 0
      %p101 = por %p99, %p100
      %s103 = sadd.s32 %s102, 1
      %p106 = scmp.eq.s32.totalorder %s21, 1
      %p107 = scmp.ne.s32.totalorder %s102, %s104
      %p108 = scmp.eq.s32.totalorder %s21, 0
      %p109 = por %p107, %p108
      %p110 = scmp.ne.s32.totalorder %s102, %s104
      %p111 = scmp.eq.s32.totalorder %s26, 1
      %p112 = por %p110, %p111
      %p113 = scmp.ne.s32.totalorder %s104, %s105
      %p114 = scmp.eq.s32.totalorder %s26, 0
      %p115 = por %p113, %p114
      %p116 = scmp.ne.s32.totalorder %s104, %s105
      %p117 = scmp.eq.s32.totalorder %s27, 1
      %p118 = por %p116, %p117
      %p120 = scmp.ne.s32.totalorder %s105, %s119
      %p121 = scmp.eq.s32.totalorder %s27, 0
      %p122 = por %p120, %p121
      %s124 = sadd.s32 %s123, 1
      %p127 = scmp.eq.s32.totalorder %s21, 1
      %p128 = scmp.ne.s32.totalorder %s123, %s125
      %p129 = scmp.eq.s32.totalorder %s21, 0
      %p130 = por %p128, %p129
      %p131 = scmp.ne.s32.totalorder %s123, %s125
      %p132 = scmp.eq.s32.totalorder %s26, 1
      %p133 = por %p131, %p132
      %p134 = scmp.ne.s32.totalorder %s125, %s126
      %p135 = scmp.eq.s32.totalorder %s26, 0
      %p136 = por %p134, %p135
      %p137 = scmp.ne.s32.totalorder %s125, %s126
      %p138 = scmp.eq.s32.totalorder %s27, 1
      %p139 = por %p137, %p138
      %p141 = scmp.ne.s32.totalorder %s126, %s140
      %p142 = scmp.eq.s32.totalorder %s27, 0
      %p143 = por %p141, %p142
      %s145 = sadd.s32 %s144, 1
      %p148 = scmp.eq.s32.totalorder %s21, 1
      %p149 = scmp.ne.s32.totalorder %s144, %s146
      %p150 = scmp.eq.s32.totalorder %s21, 0
      %p151 = por %p149, %p150
      %p152 = scmp.ne.s32.totalorder %s144, %s146
      %p153 = scmp.eq.s32.totalorder %s26, 1
      %p154 = por %p152, %p153
      %p155 = scmp.ne.s32.totalorder %s146, %s147
      %p156 = scmp.eq.s32.totalorder %s26, 0
      %p157 = por %p155, %p156
      %p158 = scmp.ne.s32.totalorder %s146, %s147
      %p159 = scmp.eq.s32.totalorder %s27, 1
      %p160 = por %p158, %p159
      %p162 = scmp.ne.s32.totalorder %s147, %s161
      %p163 = scmp.eq.s32.totalorder %s27, 0
      %p164 = por %p162, %p163
      %s166 = sadd.s32 %s165, 1
      %p169 = scmp.eq.s32.totalorder %s21, 1
      %p170 = scmp.ne.s32.totalorder %s165, %s167
      %p171 = scmp.eq.s32.totalorder %s21, 0
      %p172 = por %p170, %p171
      %p173 = scmp.ne.s32.totalorder %s165, %s167
      %p174 = scmp.eq.s32.totalorder %s26, 1
      %p175 = por %p173, %p174
      %p176 = scmp.ne.s32.totalorder %s167, %s168
      %p177 = scmp.eq.s32.totalorder %s26, 0
      %p178 = por %p176, %p177
      %p179 = scmp.ne.s32.totalorder %s167, %s168
      %p180 = scmp.eq.s32.totalorder %s27, 1
      %p181 = por %p179, %p180
      %p183 = scmp.ne.s32.totalorder %s168, %s182
      %p184 = scmp.eq.s32.totalorder %s27, 0
      %p185 = por %p183, %p184
      %s187 = sadd.s32 %s186, 1
      %p190 = scmp.eq.s32.totalorder %s21, 1
      %p191 = scmp.ne.s32.totalorder %s186, %s188
      %p192 = scmp.eq.s32.totalorder %s21, 0
      %p193 = por %p191, %p192
      %p194 = scmp.ne.s32.totalorder %s186, %s188
      %p195 = scmp.eq.s32.totalorder %s26, 1
      %p196 = por %p194, %p195
      %p197 = scmp.ne.s32.totalorder %s188, %s189
      %p198 = scmp.eq.s32.totalorder %s26, 0
      %p199 = por %p197, %p198
      %p200 = scmp.ne.s32.totalorder %s188, %s189
      %p201 = scmp.eq.s32.totalorder %s27, 1
      %p202 = por %p200, %p201
      %p204 = scmp.ne.s32.totalorder %s189, %s203
      %p205 = scmp.eq.s32.totalorder %s27, 0
      %p206 = por %p204, %p205
      %s208 = sadd.s32 %s207, 1
      %p211 = scmp.eq.s32.totalorder %s21, 1
      %p212 = scmp.ne.s32.totalorder %s207, %s209
      %p213 = scmp.eq.s32.totalorder %s21, 0
      %p214 = por %p212, %p213
      %p215 = scmp.ne.s32.totalorder %s207, %s209
      %p216 = scmp.eq.s32.totalorder %s26, 1
      %p217 = por %p215, %p216
      %p218 = scmp.ne.s32.totalorder %s209, %s210
      %p219 = scmp.eq.s32.totalorder %s26, 0
      %p220 = por %p218, %p219
      %p221 = scmp.ne.s32.totalorder %s209, %s210
      %p222 = scmp.eq.s32.totalorder %s27, 1
      %p223 = por %p221, %p222
      %p225 = scmp.ne.s32.totalorder %s210, %s224
      %p226 = scmp.eq.s32.totalorder %s27, 0
      %p227 = por %p225, %p226
      %s228 = ssub.s32 %s21, %s28
      %p229 = scmp.eq.s32.totalorder %s228, 0
      %s231 = sadd.s32 %s230, 1
      %s232 = scalar_select %p229, %s230, %s231
      %p235 = pneg %p229
      %p236 = scmp.eq.s32.totalorder %s21, 1
      %p237 = por %p235, %p236
      %p238 = scmp.ne.s32.totalorder %s230, %s233
      %p239 = scmp.eq.s32.totalorder %s21, 0
      %p240 = por %p238, %p239
      %p241 = scmp.ne.s32.totalorder %s230, %s233
      %p242 = scmp.eq.s32.totalorder %s26, 1
      %p243 = por %p241, %p242
      %p244 = scmp.ne.s32.totalorder %s233, %s234
      %p245 = scmp.eq.s32.totalorder %s26, 0
      %p246 = por %p244, %p245
      %p247 = scmp.ne.s32.totalorder %s233, %s234
      %p248 = scmp.eq.s32.totalorder %s27, 1
      %p249 = por %p247, %p248
      %p251 = scmp.ne.s32.totalorder %s234, %s250
      %p252 = scmp.eq.s32.totalorder %s27, 0
      %p253 = por %p251, %p252
      %p254 = scmp.le.s32.totalorder 1, %s21
      %p255 = scmp.lt.s32.totalorder %s21, 3
      %p256 = pnand %p254, %p255
      %p257 = pneg %p256
      // Predicated region
      $region9: #{tpu_custom_call.1} parent=5 // pred_check
        _
      $region10: #{tpu_custom_call.1} parent=5 // pred_check_branch
        %259 = sbr.rel (%p256) target = $region12
      $region11: #{tpu_custom_call.1} parent=5 // pred_region
        %s260 = ssub.s32 %s21, 1
        // Predicated region
        $region13: #{tpu_custom_call.1} parent=11 // pred_check
          %p261 = pneg %p94
        $region14: #{tpu_custom_call.1} parent=11 // pred_check_branch
          %263 = sbr.rel (%p261) target = $region16
        $region15: #{tpu_custom_call.1} parent=11 // pred_region
          _
        $region16: #{tpu_custom_call.1} parent=11 // pred_fallthru
          _
        // Predicated region
        $region17: #{tpu_custom_call.1} parent=11 // pred_check
          %p264 = pneg %p115
        $region18: #{tpu_custom_call.1} parent=11 // pred_check_branch
          %266 = sbr.rel (%p264) target = $region20
        $region19: #{tpu_custom_call.1} parent=11 // pred_region
          _
        $region20: #{tpu_custom_call.1} parent=11 // pred_fallthru
          _
        // Predicated region
        $region21: #{tpu_custom_call.1} parent=11 // pred_check
          %p267 = pneg %p136
        $region22: #{tpu_custom_call.1} parent=11 // pred_check_branch
          %269 = sbr.rel (%p267) target = $region24
        $region23: #{tpu_custom_call.1} parent=11 // pred_region
          _
        $region24: #{tpu_custom_call.1} parent=11 // pred_fallthru
          _
        // Predicated region
        $region25: #{tpu_custom_call.1} parent=11 // pred_check
          %p270 = pneg %p157
        $region26: #{tpu_custom_call.1} parent=11 // pred_check_branch
          %272 = sbr.rel (%p270) target = $region28
        $region27: #{tpu_custom_call.1} parent=11 // pred_region
          _
        $region28: #{tpu_custom_call.1} parent=11 // pred_fallthru
          _
        // Predicated region
        $region29: #{tpu_custom_call.1} parent=11 // pred_check
          %p273 = pneg %p178
        $region30: #{tpu_custom_call.1} parent=11 // pred_check_branch
          %275 = sbr.rel (%p273) target = $region32
        $region31: #{tpu_custom_call.1} parent=11 // pred_region
          _
        $region32: #{tpu_custom_call.1} parent=11 // pred_fallthru
          _
        // Predicated region
        $region33: #{tpu_custom_call.1} parent=11 // pred_check
          %p276 = pneg %p199
        $region34: #{tpu_custom_call.1} parent=11 // pred_check_branch
          %278 = sbr.rel (%p276) target = $region36
        $region35: #{tpu_custom_call.1} parent=11 // pred_region
          _
        $region36: #{tpu_custom_call.1} parent=11 // pred_fallthru
          _
        // Predicated region
        $region37: #{tpu_custom_call.1} parent=11 // pred_check
          %p279 = pneg %p220
        $region38: #{tpu_custom_call.1} parent=11 // pred_check_branch
          %281 = sbr.rel (%p279) target = $region40
        $region39: #{tpu_custom_call.1} parent=11 // pred_region
          _
        $region40: #{tpu_custom_call.1} parent=11 // pred_fallthru
          _
      $region12: #{tpu_custom_call.1} parent=5 // pred_fallthru
        _
      %p282 = scmp.lt.s32.totalorder %s21, 2
      // Predicated region
      $region41: #{tpu_custom_call.1} parent=5 // pred_check
        %p283 = pneg %p282
      $region42: #{tpu_custom_call.1} parent=5 // pred_check_branch
        %285 = sbr.rel (%p283) target = $region44
      $region43: #{tpu_custom_call.1} parent=5 // pred_region
        // Predicated region
        $region45: #{tpu_custom_call.1} parent=43 // pred_check
          %p286 = pneg %p41
        $region46: #{tpu_custom_call.1} parent=43 // pred_check_branch
          %288 = sbr.rel (%p286) target = $region48
        $region47: #{tpu_custom_call.1} parent=43 // pred_region
          %s289 = smul.u32 4, %s21
          %p290 = scmp.lt.s32.totalorder %s289, 7
          %s291 = scalar_select %p290, %s289, 7
          %s292 = smul.addr %s291, 2
          %s293 = smul.addr %s292, 8
          %s294 = scalar_lea.vmem %s0, %s293
          %s295 = smul.u32 4, %s21
        $region48: #{tpu_custom_call.1} parent=43 // pred_fallthru
          _
        // Predicated region
        $region49: #{tpu_custom_call.1} parent=43 // pred_check
          %p296 = pneg %p67
        $region50: #{tpu_custom_call.1} parent=43 // pred_check_branch
          %298 = sbr.rel (%p296) target = $region52
        $region51: #{tpu_custom_call.1} parent=43 // pred_region
          %s299 = sand.u32 %s57, 1
          %s300 = scalar_lea.sflag [#allocation3], %s299
          %s301 = sand.u32 %s57, 1
          %s302 = smul.addr %s301, 576
          %s303 = scalar_lea.vmem [#allocation2], %s302
          %s304 = smul.u32 36, %s21
          %s306 = ssub.s32 9216, 9216
          %307 = vsyncadd %s300, %s306
          %s308 = smul.addr %s304, 2
          %s309 = smul.addr %s308, 128
          %s310 = scalar_lea.hbm %s1, %s309
          %s311 = sshll.u32 %s303, 4
          %s312 = int_to_ptr.vmem [resolvable:$true] %s311
          %317 = dma.hbm_to_vmem [thread:$0]  %s310, 9216, %s312, %s300, 256, 256, 16
        $region52: #{tpu_custom_call.1} parent=43 // pred_fallthru
          _
      $region44: #{tpu_custom_call.1} parent=5 // pred_fallthru
        _
      %p318 = scmp.le.s32.totalorder 1, %s21
      %p319 = scmp.lt.s32.totalorder %s21, 3
      %p320 = pnand %p318, %p319
      %p321 = pneg %p320
      // Predicated region
      $region53: #{tpu_custom_call.1} parent=5 // pred_check
        _
      $region54: #{tpu_custom_call.1} parent=5 // pred_check_branch
        %323 = sbr.rel (%p320) target = $region56
      $region55: #{tpu_custom_call.1} parent=5 // pred_region
        %s324 = ssub.s32 %s21, 1
        %s325 = sand.u32 %s60, 1
        %s326 = scalar_lea.sflag [#allocation3], %s325
        %s327 = sand.u32 %s60, 1
        %s328 = smul.addr %s327, 576
        %s329 = scalar_lea.vmem [#allocation2], %s328
        // Predicated region
        $region57: #{tpu_custom_call.1} parent=55 // pred_check
          %p330 = pneg %p73
        $region58: #{tpu_custom_call.1} parent=55 // pred_check_branch
          %332 = sbr.rel (%p330) target = $region60
        $region59: #{tpu_custom_call.1} parent=55 // pred_region
          %333 = dma.done %s326, 9216
        $region60: #{tpu_custom_call.1} parent=55 // pred_fallthru
          _
        %s334 = smul.u32 4, %s26
        %p335 = scmp.lt.s32.totalorder %s334, 7
        %s336 = scalar_select %p335, %s334, 7
        %s337 = smul.addr %s336, 2
        %s338 = smul.addr %s337, 8
        %s339 = scalar_lea.vmem %s0, %s338
        %p340 = pneg %p47
        %p341 = pneg %p44
        %s342 = sand.u32 %s60, 1
        %s343 = scalar_lea.sflag [#allocation3], %s342
        %s344 = sand.u32 %s60, 1
        %s345 = smul.addr %s344, 576
        %s346 = scalar_lea.vmem [#allocation2], %s345
        %p347 = pneg %p73
        %p348 = pneg %p70
        %p349 = pneg %p94
        %p350 = pneg %p91
        %p351 = pneg %p115
        %p352 = pneg %p112
        %p353 = pneg %p136
        %p354 = pneg %p133
        %p355 = pneg %p157
        %p356 = pneg %p154
        %p357 = pneg %p178
        %p358 = pneg %p175
        %p359 = pneg %p199
        %p360 = pneg %p196
        %p361 = pneg %p220
        %p362 = pneg %p217
        %p363 = pneg %p246
        %p364 = pneg %p243
        %s365 = sand.u32 %s233, 1
        %s366 = scalar_lea.sflag [#allocation4], %s365
        %s367 = sand.u32 %s233, 1
        %s368 = smul.addr %s367, 64
        %s369 = scalar_lea.vmem [#allocation5], %s368
        %s370 = smul.u32 4, %s26
        %p371 = scmp.lt.s32.totalorder %s370, 7
        %s372 = scalar_select %p371, %s370, 7
        %s373 = smul.addr %s372, 2
        %s374 = smul.addr %s373, 8
        %s375 = scalar_lea.vmem %s0, %s374
        %s376 = smul.u32 4, %s26
        %s377 = smul.u32 36, %s26
        %s378 = smul.u32 4, %s26
        %v379 = vld [vmem:[%s375] sm:$0xff]
        %v380 = vld [vmem:[%s375 + $0x8] sm:$0xff]
        %v381 = vld [vmem:[%s375 + $0x10] sm:$0xff]
        %v382 = vld [vmem:[%s375 + $0x18] sm:$0xff]
        %v383 = vld [vmem:[%s375 + $0x20] sm:$0xff]
        %v384 = vld [vmem:[%s375 + $0x28] sm:$0xff]
        %v385 = vld [vmem:[%s375 + $0x30] sm:$0xff]
        %v386 = vld [vmem:[%s375 + $0x38] sm:$0xff]
        %v387 = vld [vmem:[%s2] sm:$0xff]
        %v388 = vld [vmem:[%s2 + $0x8] sm:$0xff]
        %v389 = vld [vmem:[%s2 + $0x10] sm:$0xff]
        %v390 = vld [vmem:[%s2 + $0x18] sm:$0xff]
        %v391 = vld [vmem:[%s2 + $0x20] sm:$0xff]
        %v392 = vld [vmem:[%s2 + $0x28] sm:$0xff]
        %v393 = vld [vmem:[%s2 + $0x30] sm:$0xff]
        %v394 = vld [vmem:[%s2 + $0x38] sm:$0xff]
        %v395 = vld [vmem:[%s2 + $0x40] sm:$0xff]
        %v396 = vld [vmem:[%s2 + $0x48] sm:$0xff]
        %v397 = vld [vmem:[%s2 + $0x50] sm:$0xff]
        %v398 = vld [vmem:[%s2 + $0x58] sm:$0xff]
        %v399 = vld [vmem:[%s2 + $0x60] sm:$0xff]
        %v400 = vld [vmem:[%s2 + $0x68] sm:$0xff]
        %v401 = vld [vmem:[%s2 + $0x70] sm:$0xff]
        %v402 = vld [vmem:[%s2 + $0x78] sm:$0xff]
        %v403 = vld [vmem:[%s2 + $0x80] sm:$0xff]
        %v404 = vld [vmem:[%s2 + $0x88] sm:$0xff]
        %v405 = vld [vmem:[%s2 + $0x90] sm:$0xff]
        %v406 = vld [vmem:[%s2 + $0x98] sm:$0xff]
        %v407 = vld [vmem:[%s2 + $0xa0] sm:$0xff]
        %v408 = vld [vmem:[%s2 + $0xa8] sm:$0xff]
        %v409 = vld [vmem:[%s2 + $0xb0] sm:$0xff]
        %v410 = vld [vmem:[%s2 + $0xb8] sm:$0xff]
        %v411 = vld [vmem:[%s2 + $0xc0] sm:$0xff]
        %v412 = vld [vmem:[%s2 + $0xc8] sm:$0xff]
        %v413 = vld [vmem:[%s2 + $0xd0] sm:$0xff]
        %v414 = vld [vmem:[%s2 + $0xd8] sm:$0xff]
        %v415 = vld [vmem:[%s2 + $0xe0] sm:$0xff]
        %v416 = vld [vmem:[%s2 + $0xe8] sm:$0xff]
        %v417 = vld [vmem:[%s2 + $0xf0] sm:$0xff]
        %v418 = vld [vmem:[%s2 + $0xf8] sm:$0xff]
        %v419 = vld [vmem:[%s3] sm:$0xff]
        %v420 = vld [vmem:[%s3 + $0x8] sm:$0xff]
        %v421 = vld [vmem:[%s3 + $0x10] sm:$0xff]
        %v422 = vld [vmem:[%s3 + $0x18] sm:$0xff]
        %v423 = vld [vmem:[%s3 + $0x20] sm:$0xff]
        %v424 = vld [vmem:[%s3 + $0x28] sm:$0xff]
        %v425 = vld [vmem:[%s3 + $0x30] sm:$0xff]
        %v426 = vld [vmem:[%s3 + $0x38] sm:$0xff]
        %v427 = vld [vmem:[%s4] sm:$0xff]
        %v428 = vld [vmem:[%s4 + $0x8] sm:$0xff]
        %v429 = vld [vmem:[%s4 + $0x10] sm:$0xff]
        %v430 = vld [vmem:[%s4 + $0x18] sm:$0xff]
        %v431 = vld [vmem:[%s6] sm:$0xff]
        %v432 = vld [vmem:[%s7] sm:$0xf]
        %v433 = vld [vmem:[%s8] sm:$0xff]
        %v434 = vld [vmem:[%s8 + $0x8] sm:$0xff]
        %v435 = vld [vmem:[%s8 + $0x10] sm:$0xff]
        %v436 = vld [vmem:[%s8 + $0x18] sm:$0xff]
        %437 = vmatprep.subr.mxu0 0.0
        %438 = vmatpush1.msra.mxu0 %v387
        %439 = vmatprep.subr.mxu0 0.0
        %440 = vmatpush1.msra.mxu0 %v388
        %441 = vmatprep.subr.mxu0 0.0
        %442 = vmatpush1.msra.mxu0 %v389
        %443 = vmatprep.subr.mxu0 0.0
        %444 = vmatpush1.msra.mxu0 %v390
        %445 = vmatprep.subr.mxu0 0.0
        %446 = vmatpush1.msra.mxu0 %v391
        %447 = vmatprep.subr.mxu0 0.0
        %448 = vmatpush1.msra.mxu0 %v392
        %449 = vmatprep.subr.mxu0 0.0
        %450 = vmatpush1.msra.mxu0 %v393
        %451 = vmatprep.subr.mxu0 0.0
        %452 = vmatpush1.msra.mxu0 %v394
        %453 = vmatprep.subr.mxu0 0.0
        %454 = vmatpush1.msra.mxu0 %v395
        %455 = vmatprep.subr.mxu0 0.0
        %456 = vmatpush1.msra.mxu0 %v396
        %457 = vmatprep.subr.mxu0 0.0
        %458 = vmatpush1.msra.mxu0 %v397
        %459 = vmatprep.subr.mxu0 0.0
        %460 = vmatpush1.msra.mxu0 %v398
        %461 = vmatprep.subr.mxu0 0.0
        %462 = vmatpush1.msra.mxu0 %v399
        %463 = vmatprep.subr.mxu0 0.0
        %464 = vmatpush1.msra.mxu0 %v400
        %465 = vmatprep.subr.mxu0 0.0
        %466 = vmatpush1.msra.mxu0 %v401
        %467 = vmatprep.subr.mxu0 0.0
        %468 = vmatpush1.msra.mxu0 %v402
        %469 = vmatprep.subr.mxu0 0.0
        %470 = vmatpush1.msra.mxu0 %v403
        %471 = vmatprep.subr.mxu0 0.0
        %472 = vmatpush1.msra.mxu0 %v404
        %473 = vmatprep.subr.mxu0 0.0
        %474 = vmatpush1.msra.mxu0 %v405
        %475 = vmatprep.subr.mxu0 0.0
        %476 = vmatpush1.msra.mxu0 %v406
        %477 = vmatprep.subr.mxu0 0.0
        %478 = vmatpush1.msra.mxu0 %v407
        %479 = vmatprep.subr.mxu0 0.0
        %480 = vmatpush1.msra.mxu0 %v408
        %481 = vmatprep.subr.mxu0 0.0
        %482 = vmatpush1.msra.mxu0 %v409
        %483 = vmatprep.subr.mxu0 0.0
        %484 = vmatpush1.msra.mxu0 %v410
        %485 = vmatprep.subr.mxu0 0.0
        %486 = vmatpush1.msra.mxu0 %v411
        %487 = vmatprep.subr.mxu0 0.0
        %488 = vmatpush1.msra.mxu0 %v412
        %489 = vmatprep.subr.mxu0 0.0
        %490 = vmatpush1.msra.mxu0 %v413
        %491 = vmatprep.subr.mxu0 0.0
        %492 = vmatpush1.msra.mxu0 %v414
        %493 = vmatprep.subr.mxu0 0.0
        %494 = vmatpush1.msra.mxu0 %v415
        %495 = vmatprep.subr.mxu0 0.0
        %496 = vmatpush1.msra.mxu0 %v416
        %497 = vmatprep.subr.mxu0 0.0
        %498 = vmatpush1.msra.mxu0 %v417
        %499 = vmatprep.subr.mxu0 0.0
        %500 = vmatpush1.msra.mxu0 %v418
        %501 = vmatprep.mubr.f32.mxu0 %v380
        %502 = vmatmul.mubr.f32.gmra.mrb[0].mxu0 %v379
        %v503 = vpop.f32.mrb[0].mxu0
        %v504 = vadd.f32 0.0, %v503
        %v505 = vpop.f32.mrb[0].mxu0
        %506 = vmatprep.mubr.f32.mxu0 %v382
        %507 = vmatmul.mubr.f32.gmra.mrb[0].mxu0 %v381
        %v508 = vpop.f32.mrb[0].mxu0
        %v509 = vadd.f32 0.0, %v508
        %v510 = vpop.f32.mrb[0].mxu0
        %511 = vmatprep.mubr.f32.mxu0 %v384
        %512 = vmatmul.mubr.f32.gmra.mrb[0].mxu0 %v383
        %v513 = vpop.f32.mrb[0].mxu0
        %v514 = vadd.f32 0.0, %v513
        %v515 = vpop.f32.mrb[0].mxu0
        %516 = vmatprep.mubr.f32.mxu0 %v386
        %517 = vmatmul.mubr.f32.gmra.mrb[0].mxu0 %v385
        %v518 = vpop.f32.mrb[0].mxu0
        %v519 = vadd.f32 0.0, %v518
        %v520 = vpop.f32.mrb[0].mxu0
        %521 = vdwg.mxu0
        %523 = vset.pattern.permute.xlu0 4
        %524 = vperm.xlu0 %523, %v433
        %v525 = vpop.permute.xlu0 %524
        %528 = vset.pattern.permute.xlu0 4
        %529 = vperm.xlu0 %528, %v434
        %v530 = vpop.permute.xlu0 %529
        %533 = vset.pattern.permute.xlu0 4
        %534 = vperm.xlu0 %533, %v435
        %v535 = vpop.permute.xlu0 %534
        %538 = vset.pattern.permute.xlu0 4
        %539 = vperm.xlu0 %538, %v436
        %v540 = vpop.permute.xlu0 %539
        %vm542 = vcmask 261120
        %v544 = vsel %vm542, %v427, 0
        %v547 = vsel %vm542, %v428, 0
        %v550 = vsel %vm542, %v429, 0
        %v553 = vsel %vm542, %v430, 0
        %555 = vmatprep.subr.mxu0 0.0
        %556 = vmatpush1.msra.mxu0 %v504
        %557 = vmatprep.subr.mxu0 0.0
        %558 = vmatpush1.msra.mxu0 %v509
        %559 = vmatprep.subr.mxu0 0.0
        %560 = vmatpush1.msra.mxu0 %v514
        %561 = vmatprep.subr.mxu0 0.0
        %562 = vmatpush1.msra.mxu0 %v519
        %563 = vmatprep.subr.mxu0 0.0
        %564 = vmatpush1.msra.mxu0 0.0
        %565 = vmatprep.subr.mxu0 0.0
        %566 = vmatpush1.msra.mxu0 0.0
        %567 = vmatprep.subr.mxu0 0.0
        %568 = vmatpush1.msra.mxu0 0.0
        %569 = vmatprep.subr.mxu0 0.0
        %570 = vmatpush1.msra.mxu0 0.0
        %571 = vmatprep.subr.mxu0 0.0
        %572 = vmatpush1.msra.mxu0 0.0
        %573 = vmatprep.subr.mxu0 0.0
        %574 = vmatpush1.msra.mxu0 0.0
        %575 = vmatprep.subr.mxu0 0.0
        %576 = vmatpush1.msra.mxu0 0.0
        %577 = vmatprep.subr.mxu0 0.0
        %578 = vmatpush1.msra.mxu0 0.0
        %579 = vmatprep.subr.mxu0 0.0
        %580 = vmatpush1.msra.mxu0 0.0
        %581 = vmatprep.subr.mxu0 0.0
        %582 = vmatpush1.msra.mxu0 0.0
        %583 = vmatprep.subr.mxu0 0.0
        %584 = vmatpush1.msra.mxu0 0.0
        %585 = vmatprep.subr.mxu0 0.0
        %586 = vmatpush1.msra.mxu0 0.0
        %587 = vmatprep.subr.mxu0 0.0
        %588 = vmatpush1.msra.mxu0 0.0
        %589 = vmatprep.subr.mxu0 0.0
        %590 = vmatpush1.msra.mxu0 0.0
        %591 = vmatprep.subr.mxu0 0.0
        %592 = vmatpush1.msra.mxu0 0.0
        %593 = vmatprep.subr.mxu0 0.0
        %594 = vmatpush1.msra.mxu0 0.0
        %595 = vmatprep.subr.mxu0 0.0
        %596 = vmatpush1.msra.mxu0 0.0
        %597 = vmatprep.subr.mxu0 0.0
        %598 = vmatpush1.msra.mxu0 0.0
        %599 = vmatprep.subr.mxu0 0.0
        %600 = vmatpush1.msra.mxu0 0.0
        %601 = vmatprep.subr.mxu0 0.0
        %602 = vmatpush1.msra.mxu0 0.0
        %603 = vmatprep.subr.mxu0 0.0
        %604 = vmatpush1.msra.mxu0 0.0
        %605 = vmatprep.subr.mxu0 0.0
        %606 = vmatpush1.msra.mxu0 0.0
        %607 = vmatprep.subr.mxu0 0.0
        %608 = vmatpush1.msra.mxu0 0.0
        %609 = vmatprep.subr.mxu0 0.0
        %610 = vmatpush1.msra.mxu0 0.0
        %611 = vmatprep.subr.mxu0 0.0
        %612 = vmatpush1.msra.mxu0 0.0
        %613 = vmatprep.subr.mxu0 0.0
        %614 = vmatpush1.msra.mxu0 0.0
        %615 = vmatprep.subr.mxu0 0.0
        %616 = vmatpush1.msra.mxu0 0.0
        %617 = vmatprep.subr.mxu0 0.0
        %618 = vmatpush1.msra.mxu0 0.0
        %619 = vmatprep.mubr.f32.mxu0 0.0
        %620 = vmatmul.mubr.f32.gmra.mrb[0].mxu0 %v544
        %v621 = vpop.f32.mrb[0].mxu0
        %v622 = vadd.f32 %v525, %v621
        %v623 = vpop.f32.mrb[0].mxu0
        %624 = vmatprep.mubr.f32.mxu0 0.0
        %625 = vmatmul.mubr.f32.gmra.mrb[0].mxu0 %v547
        %v626 = vpop.f32.mrb[0].mxu0
        %v627 = vadd.f32 %v530, %v626
        %v628 = vpop.f32.mrb[0].mxu0
        %629 = vmatprep.mubr.f32.mxu0 0.0
        %630 = vmatmul.mubr.f32.gmra.mrb[0].mxu0 %v550
        %v631 = vpop.f32.mrb[0].mxu0
        %v632 = vadd.f32 %v535, %v631
        %v633 = vpop.f32.mrb[0].mxu0
        %634 = vmatprep.mubr.f32.mxu0 0.0
        %635 = vmatmul.mubr.f32.gmra.mrb[0].mxu0 %v553
        %v636 = vpop.f32.mrb[0].mxu0
        %v637 = vadd.f32 %v540, %v636
        %v638 = vpop.f32.mrb[0].mxu0
        %639 = vdwg.mxu0
        %v640 = vxor.u32 %v622, 2147483648
        %v641 = vxor.u32 %v627, 2147483648
        %v642 = vxor.u32 %v632, 2147483648
        %v643 = vxor.u32 %v637, 2147483648
        %v644 = vmul.f32 %v640, 1.442695
        %v645 = vpow.pop %v644
        %v646 = vmul.f32 %v641, 1.442695
        %v647 = vpow.pop %v646
        %v648 = vmul.f32 %v642, 1.442695
        %v649 = vpow.pop %v648
        %v650 = vmul.f32 %v643, 1.442695
        %v651 = vpow.pop %v650
        %v652 = vadd.f32 %v645, 1.0
        %v653 = vadd.f32 %v647, 1.0
        %v654 = vadd.f32 %v649, 1.0
        %v655 = vadd.f32 %v651, 1.0
        %v656 = vrcp.pop %v652
        %v657 = vmul.f32 1.0, %v656
        %v658 = vrcp.pop %v653
        %v659 = vmul.f32 1.0, %v658
        %v660 = vrcp.pop %v654
        %v661 = vmul.f32 1.0, %v660
        %v662 = vrcp.pop %v655
        %v663 = vmul.f32 1.0, %v662
        %v664 = vlaneseq
        %v665 = vand.u32 %v664, 127
        %vm666 = vcmp.lt.s32.totalorder %v665, 16
        %v667 = vsel %vm666, 1, 0
        %vm668 = vcmp.eq.s32.totalorder %v667, 1
        %v669 = vsel %vm668, %v657, 0.0
        %v670 = vsel %vm668, %v659, 0.0
        %v671 = vsel %vm668, %v661, 0.0
        %v672 = vsel %vm668, %v663, 0.0
        %v674 = vsel %vm542, %v669, 0
        %v677 = vsel %vm542, %v670, 0
        %v680 = vsel %vm542, %v671, 0
        %v683 = vsel %vm542, %v672, 0
        %685 = vmatprep.subr.mxu0 %v420
        %686 = vmatpush1.msra.mxu0 %v419
        %687 = vmatprep.subr.mxu0 %v422
        %688 = vmatpush1.msra.mxu0 %v421
        %689 = vmatprep.subr.mxu0 %v424
        %690 = vmatpush1.msra.mxu0 %v423
        %691 = vmatprep.subr.mxu0 %v426
        %692 = vmatpush1.msra.mxu0 %v425
        %693 = vmatprep.subr.mxu0 0.0
        %694 = vmatpush1.msra.mxu0 0.0
        %695 = vmatprep.subr.mxu0 0.0
        %696 = vmatpush1.msra.mxu0 0.0
        %697 = vmatprep.subr.mxu0 0.0
        %698 = vmatpush1.msra.mxu0 0.0
        %699 = vmatprep.subr.mxu0 0.0
        %700 = vmatpush1.msra.mxu0 0.0
        %701 = vmatprep.subr.mxu0 0.0
        %702 = vmatpush1.msra.mxu0 0.0
        %703 = vmatprep.subr.mxu0 0.0
        %704 = vmatpush1.msra.mxu0 0.0
        %705 = vmatprep.subr.mxu0 0.0
        %706 = vmatpush1.msra.mxu0 0.0
        %707 = vmatprep.subr.mxu0 0.0
        %708 = vmatpush1.msra.mxu0 0.0
        %709 = vmatprep.subr.mxu0 0.0
        %710 = vmatpush1.msra.mxu0 0.0
        %711 = vmatprep.subr.mxu0 0.0
        %712 = vmatpush1.msra.mxu0 0.0
        %713 = vmatprep.subr.mxu0 0.0
        %714 = vmatpush1.msra.mxu0 0.0
        %715 = vmatprep.subr.mxu0 0.0
        %716 = vmatpush1.msra.mxu0 0.0
        %717 = vmatprep.subr.mxu0 0.0
        %718 = vmatpush1.msra.mxu0 0.0
        %719 = vmatprep.subr.mxu0 0.0
        %720 = vmatpush1.msra.mxu0 0.0
        %721 = vmatprep.subr.mxu0 0.0
        %722 = vmatpush1.msra.mxu0 0.0
        %723 = vmatprep.subr.mxu0 0.0
        %724 = vmatpush1.msra.mxu0 0.0
        %725 = vmatprep.subr.mxu0 0.0
        %726 = vmatpush1.msra.mxu0 0.0
        %727 = vmatprep.subr.mxu0 0.0
        %728 = vmatpush1.msra.mxu0 0.0
        %729 = vmatprep.subr.mxu0 0.0
        %730 = vmatpush1.msra.mxu0 0.0
        %731 = vmatprep.subr.mxu0 0.0
        %732 = vmatpush1.msra.mxu0 0.0
        %733 = vmatprep.subr.mxu0 0.0
        %734 = vmatpush1.msra.mxu0 0.0
        %735 = vmatprep.subr.mxu0 0.0
        %736 = vmatpush1.msra.mxu0 0.0
        %737 = vmatprep.subr.mxu0 0.0
        %738 = vmatpush1.msra.mxu0 0.0
        %739 = vmatprep.subr.mxu0 0.0
        %740 = vmatpush1.msra.mxu0 0.0
        %741 = vmatprep.subr.mxu0 0.0
        %742 = vmatpush1.msra.mxu0 0.0
        %743 = vmatprep.subr.mxu0 0.0
        %744 = vmatpush1.msra.mxu0 0.0
        %745 = vmatprep.subr.mxu0 0.0
        %746 = vmatpush1.msra.mxu0 0.0
        %747 = vmatprep.subr.mxu0 0.0
        %748 = vmatpush1.msra.mxu0 0.0
        %749 = vmatprep.mubr.f32.mxu0 0.0
        %750 = vmatmul.mubr.f32.gmra.mrb[0].mxu0 %v674
        %v751 = vpop.f32.mrb[0].mxu0
        %v752 = vadd.f32 0.0, %v751
        %v753 = vpop.f32.mrb[0].mxu0
        %v754 = vadd.f32 0.0, %v753
        %755 = vmatprep.mubr.f32.mxu0 0.0
        %756 = vmatmul.mubr.f32.gmra.mrb[0].mxu0 %v677
        %v757 = vpop.f32.mrb[0].mxu0
        %v758 = vadd.f32 0.0, %v757
        %v759 = vpop.f32.mrb[0].mxu0
        %v760 = vadd.f32 0.0, %v759
        %761 = vmatprep.mubr.f32.mxu0 0.0
        %762 = vmatmul.mubr.f32.gmra.mrb[0].mxu0 %v680
        %v763 = vpop.f32.mrb[0].mxu0
        %v764 = vadd.f32 0.0, %v763
        %v765 = vpop.f32.mrb[0].mxu0
        %v766 = vadd.f32 0.0, %v765
        %767 = vmatprep.mubr.f32.mxu0 0.0
        %768 = vmatmul.mubr.f32.gmra.mrb[0].mxu0 %v683
        %v769 = vpop.f32.mrb[0].mxu0
        %v770 = vadd.f32 0.0, %v769
        %v771 = vpop.f32.mrb[0].mxu0
        %v772 = vadd.f32 0.0, %v771
        %773 = vdwg.mxu0
        %vm774 = vcmp.ge.s32.totalorder %v665, 16
        %v775 = vsel %vm774, 1, 0
        %vm776 = vcmp.eq.s32.totalorder %v775, 1
        %v777 = vsel %vm776, %v657, 0.0
        %v778 = vsel %vm776, %v659, 0.0
        %v779 = vsel %vm776, %v661, 0.0
        %v780 = vsel %vm776, %v663, 0.0
        %v782 = vsel %vm542, %v777, 0
        %v785 = vsel %vm542, %v778, 0
        %v788 = vsel %vm542, %v779, 0
        %v791 = vsel %vm542, %v780, 0
        %793 = vmatprep.subr.mxu0 %v420
        %794 = vmatpush1.msra.mxu0 %v419
        %795 = vmatprep.subr.mxu0 %v422
        %796 = vmatpush1.msra.mxu0 %v421
        %797 = vmatprep.subr.mxu0 %v424
        %798 = vmatpush1.msra.mxu0 %v423
        %799 = vmatprep.subr.mxu0 %v426
        %800 = vmatpush1.msra.mxu0 %v425
        %801 = vmatprep.subr.mxu0 0.0
        %802 = vmatpush1.msra.mxu0 0.0
        %803 = vmatprep.subr.mxu0 0.0
        %804 = vmatpush1.msra.mxu0 0.0
        %805 = vmatprep.subr.mxu0 0.0
        %806 = vmatpush1.msra.mxu0 0.0
        %807 = vmatprep.subr.mxu0 0.0
        %808 = vmatpush1.msra.mxu0 0.0
        %809 = vmatprep.subr.mxu0 0.0
        %810 = vmatpush1.msra.mxu0 0.0
        %811 = vmatprep.subr.mxu0 0.0
        %812 = vmatpush1.msra.mxu0 0.0
        %813 = vmatprep.subr.mxu0 0.0
        %814 = vmatpush1.msra.mxu0 0.0
        %815 = vmatprep.subr.mxu0 0.0
        %816 = vmatpush1.msra.mxu0 0.0
        %817 = vmatprep.subr.mxu0 0.0
        %818 = vmatpush1.msra.mxu0 0.0
        %819 = vmatprep.subr.mxu0 0.0
        %820 = vmatpush1.msra.mxu0 0.0
        %821 = vmatprep.subr.mxu0 0.0
        %822 = vmatpush1.msra.mxu0 0.0
        %823 = vmatprep.subr.mxu0 0.0
        %824 = vmatpush1.msra.mxu0 0.0
        %825 = vmatprep.subr.mxu0 0.0
        %826 = vmatpush1.msra.mxu0 0.0
        %827 = vmatprep.subr.mxu0 0.0
        %828 = vmatpush1.msra.mxu0 0.0
        %829 = vmatprep.subr.mxu0 0.0
        %830 = vmatpush1.msra.mxu0 0.0
        %831 = vmatprep.subr.mxu0 0.0
        %832 = vmatpush1.msra.mxu0 0.0
        %833 = vmatprep.subr.mxu0 0.0
        %834 = vmatpush1.msra.mxu0 0.0
        %835 = vmatprep.subr.mxu0 0.0
        %836 = vmatpush1.msra.mxu0 0.0
        %837 = vmatprep.subr.mxu0 0.0
        %838 = vmatpush1.msra.mxu0 0.0
        %839 = vmatprep.subr.mxu0 0.0
        %840 = vmatpush1.msra.mxu0 0.0
        %841 = vmatprep.subr.mxu0 0.0
        %842 = vmatpush1.msra.mxu0 0.0
        %843 = vmatprep.subr.mxu0 0.0
        %844 = vmatpush1.msra.mxu0 0.0
        %845 = vmatprep.subr.mxu0 0.0
        %846 = vmatpush1.msra.mxu0 0.0
        %847 = vmatprep.subr.mxu0 0.0
        %848 = vmatpush1.msra.mxu0 0.0
        %849 = vmatprep.subr.mxu0 0.0
        %850 = vmatpush1.msra.mxu0 0.0
        %851 = vmatprep.subr.mxu0 0.0
        %852 = vmatpush1.msra.mxu0 0.0
        %853 = vmatprep.subr.mxu0 0.0
        %854 = vmatpush1.msra.mxu0 0.0
        %855 = vmatprep.subr.mxu0 0.0
        %856 = vmatpush1.msra.mxu0 0.0
        %857 = vmatprep.mubr.f32.mxu0 0.0
        %858 = vmatmul.mubr.f32.gmra.mrb[0].mxu0 %v782
        %v859 = vpop.f32.mrb[0].mxu0
        %v860 = vadd.f32 0.0, %v859
        %v861 = vpop.f32.mrb[0].mxu0
        %v862 = vadd.f32 0.0, %v861
        %863 = vmatprep.mubr.f32.mxu0 0.0
        %864 = vmatmul.mubr.f32.gmra.mrb[0].mxu0 %v785
        %v865 = vpop.f32.mrb[0].mxu0
        %v866 = vadd.f32 0.0, %v865
        %v867 = vpop.f32.mrb[0].mxu0
        %v868 = vadd.f32 0.0, %v867
        %869 = vmatprep.mubr.f32.mxu0 0.0
        %870 = vmatmul.mubr.f32.gmra.mrb[0].mxu0 %v788
        %v871 = vpop.f32.mrb[0].mxu0
        %v872 = vadd.f32 0.0, %v871
        %v873 = vpop.f32.mrb[0].mxu0
        %v874 = vadd.f32 0.0, %v873
        %875 = vmatprep.mubr.f32.mxu0 0.0
        %876 = vmatmul.mubr.f32.gmra.mrb[0].mxu0 %v791
        %v877 = vpop.f32.mrb[0].mxu0
        %v878 = vadd.f32 0.0, %v877
        %v879 = vpop.f32.mrb[0].mxu0
        %v880 = vadd.f32 0.0, %v879
        %881 = vdwg.mxu0
        %v882 = vmul.f32 %v379, %v752
        %v883 = vmul.f32 %v380, %v754
        %v884 = vmul.f32 %v381, %v758
        %v885 = vmul.f32 %v382, %v760
        %v886 = vmul.f32 %v383, %v764
        %v887 = vmul.f32 %v384, %v766
        %v888 = vmul.f32 %v385, %v770
        %v889 = vmul.f32 %v386, %v772
        %v890 = vmul.f32 %v882, %v860
        %v891 = vmul.f32 %v883, %v862
        %v892 = vmul.f32 %v884, %v866
        %v893 = vmul.f32 %v885, %v868
        %v894 = vmul.f32 %v886, %v872
        %v895 = vmul.f32 %v887, %v874
        %v896 = vmul.f32 %v888, %v878
        %v897 = vmul.f32 %v889, %v880
        %v898 = vadd.f32 %v890, %v891
        %899 = vadd.xlane.f32.xlu0 %v898
        %v900 = vpop.xlane.xlu0 %899
        %v901 = vadd.f32 %v892, %v893
        %902 = vadd.xlane.f32.xlu0 %v901
        %v903 = vpop.xlane.xlu0 %902
        %v904 = vadd.f32 %v894, %v895
        %905 = vadd.xlane.f32.xlu0 %v904
        %v906 = vpop.xlane.xlu0 %905
        %v907 = vadd.f32 %v896, %v897
        %908 = vadd.xlane.f32.xlu0 %v907
        %v909 = vpop.xlane.xlu0 %908
        %v910 = vrcp.pop 256.0
        %v911 = vmul.f32 %v900, %v910
        %v912 = vmul.f32 %v903, %v910
        %v913 = vmul.f32 %v906, %v910
        %v914 = vmul.f32 %v909, %v910
        %v915 = vsub.f32 %v890, %v911
        %v916 = vsub.f32 %v891, %v911
        %v917 = vsub.f32 %v892, %v912
        %v918 = vsub.f32 %v893, %v912
        %v919 = vsub.f32 %v894, %v913
        %v920 = vsub.f32 %v895, %v913
        %v921 = vsub.f32 %v896, %v914
        %v922 = vsub.f32 %v897, %v914
        %v923 = vmul.f32 %v915, %v915
        %v924 = vmul.f32 %v916, %v916
        %v925 = vmul.f32 %v917, %v917
        %v926 = vmul.f32 %v918, %v918
        %v927 = vmul.f32 %v919, %v919
        %v928 = vmul.f32 %v920, %v920
        %v929 = vmul.f32 %v921, %v921
        %v930 = vmul.f32 %v922, %v922
        %v931 = vadd.f32 %v923, %v924
        %932 = vadd.xlane.f32.xlu0 %v931
        %v933 = vpop.xlane.xlu0 %932
        %v934 = vadd.f32 %v925, %v926
        %935 = vadd.xlane.f32.xlu0 %v934
        %v936 = vpop.xlane.xlu0 %935
        %v937 = vadd.f32 %v927, %v928
        %938 = vadd.xlane.f32.xlu0 %v937
        %v939 = vpop.xlane.xlu0 %938
        %v940 = vadd.f32 %v929, %v930
        %941 = vadd.xlane.f32.xlu0 %v940
        %v942 = vpop.xlane.xlu0 %941
        %v943 = vmul.f32 %v933, %v910
        %v944 = vmul.f32 %v936, %v910
        %v945 = vmul.f32 %v939, %v910
        %v946 = vmul.f32 %v942, %v910
        %v947 = vadd.f32 %v943, 1e-05
        %v948 = vadd.f32 %v944, 1e-05
        %v949 = vadd.f32 %v945, 1e-05
        %v950 = vadd.f32 %v946, 1e-05
        %v951 = vrsqrt.pop %v947
        %v952 = vrsqrt.pop %v948
        %v953 = vrsqrt.pop %v949
        %v954 = vrsqrt.pop %v950
        %v955 = vmul.f32 %v915, %v951
        %v956 = vmul.f32 %v916, %v951
        %v957 = vmul.f32 %v917, %v952
        %v958 = vmul.f32 %v918, %v952
        %v959 = vmul.f32 %v919, %v953
        %v960 = vmul.f32 %v920, %v953
        %v961 = vmul.f32 %v921, %v954
        %v962 = vmul.f32 %v922, %v954
        %963 = vset.pattern.permute.xlu0 5
        %964 = vperm.xlu0 %963, %v433
        %v965 = vpop.permute.xlu0 %964
        %967 = vset.pattern.permute.xlu0 5
        %968 = vperm.xlu0 %967, %v434
        %v969 = vpop.permute.xlu0 %968
        %971 = vset.pattern.permute.xlu0 5
        %972 = vperm.xlu0 %971, %v435
        %v973 = vpop.permute.xlu0 %972
        %975 = vset.pattern.permute.xlu0 5
        %976 = vperm.xlu0 %975, %v436
        %v977 = vpop.permute.xlu0 %976
        %v979 = vmul.f32 %v965, %v955
        %v980 = vmul.f32 %v965, %v956
        %v981 = vmul.f32 %v969, %v957
        %v982 = vmul.f32 %v969, %v958
        %v983 = vmul.f32 %v973, %v959
        %v984 = vmul.f32 %v973, %v960
        %v985 = vmul.f32 %v977, %v961
        %v986 = vmul.f32 %v977, %v962
        %987 = vset.pattern.permute.xlu0 6
        %988 = vperm.xlu0 %987, %v433
        %v989 = vpop.permute.xlu0 %988
        %991 = vset.pattern.permute.xlu0 6
        %992 = vperm.xlu0 %991, %v434
        %v993 = vpop.permute.xlu0 %992
        %995 = vset.pattern.permute.xlu0 6
        %996 = vperm.xlu0 %995, %v435
        %v997 = vpop.permute.xlu0 %996
        %999 = vset.pattern.permute.xlu0 6
        %1000 = vperm.xlu0 %999, %v436
        %v1001 = vpop.permute.xlu0 %1000
        %v1003 = vadd.f32 %v979, %v989
        %v1004 = vadd.f32 %v980, %v989
        %v1005 = vadd.f32 %v981, %v993
        %v1006 = vadd.f32 %v982, %v993
        %v1007 = vadd.f32 %v983, %v997
        %v1008 = vadd.f32 %v984, %v997
        %v1009 = vadd.f32 %v985, %v1001
        %v1010 = vadd.f32 %v986, %v1001
        %v1011 = vld [vmem:[%s5] sm:$0xff]
        %v1012 = vld [vmem:[%s5 + $0x8] sm:$0xff]
        %v1013 = vld [vmem:[%s5 + $0x10] sm:$0xff]
        %v1014 = vld [vmem:[%s5 + $0x18] sm:$0xff]
        %v1015 = vld [vmem:[%s5 + $0x20] sm:$0xff]
        %v1016 = vld [vmem:[%s5 + $0x28] sm:$0xff]
        %v1017 = vld [vmem:[%s5 + $0x30] sm:$0xff]
        %v1018 = vld [vmem:[%s5 + $0x38] sm:$0xff]
        %v1019 = vld [vmem:[%s5 + $0x40] sm:$0xff]
        %v1020 = vld [vmem:[%s5 + $0x48] sm:$0xff]
        %v1021 = vld [vmem:[%s5 + $0x50] sm:$0xff]
        %v1022 = vld [vmem:[%s5 + $0x58] sm:$0xff]
        %v1023 = vld [vmem:[%s329] sm:$0xff]
        %v1024 = vld [vmem:[%s329 + $0x8] sm:$0xff]
        %v1025 = vld [vmem:[%s329 + $0x10] sm:$0xff]
        %v1026 = vld [vmem:[%s329 + $0x18] sm:$0xff]
        %v1027 = vld [vmem:[%s329 + $0x20] sm:$0xff]
        %v1028 = vld [vmem:[%s329 + $0x28] sm:$0xff]
        %v1029 = vld [vmem:[%s329 + $0x30] sm:$0xff]
        %v1030 = vld [vmem:[%s329 + $0x38] sm:$0xff]
        %v1031 = vld [vmem:[%s329 + $0x40] sm:$0xff]
        %v1032 = vld [vmem:[%s329 + $0x48] sm:$0xff]
        %v1033 = vld [vmem:[%s329 + $0x50] sm:$0xff]
        %v1034 = vld [vmem:[%s329 + $0x58] sm:$0xff]
        %v1035 = vld [vmem:[%s329 + $0x60] sm:$0xff]
        %v1036 = vld [vmem:[%s329 + $0x68] sm:$0xff]
        %v1037 = vld [vmem:[%s329 + $0x70] sm:$0xff]
        %v1038 = vld [vmem:[%s329 + $0x78] sm:$0xff]
        %v1039 = vld [vmem:[%s329 + $0x80] sm:$0xff]
        %v1040 = vld [vmem:[%s329 + $0x88] sm:$0xff]
        %v1041 = vld [vmem:[%s329 + $0x90] sm:$0xff]
        %v1042 = vld [vmem:[%s329 + $0x98] sm:$0xff]
        %v1043 = vld [vmem:[%s329 + $0xa0] sm:$0xff]
        %v1044 = vld [vmem:[%s329 + $0xa8] sm:$0xff]
        %v1045 = vld [vmem:[%s329 + $0xb0] sm:$0xff]
        %v1046 = vld [vmem:[%s329 + $0xb8] sm:$0xff]
        %v1047 = vld [vmem:[%s329 + $0xc0] sm:$0xff]
        %v1048 = vld [vmem:[%s329 + $0xc8] sm:$0xff]
        %v1049 = vld [vmem:[%s329 + $0xd0] sm:$0xff]
        %v1050 = vld [vmem:[%s329 + $0xd8] sm:$0xff]
        %v1051 = vld [vmem:[%s329 + $0xe0] sm:$0xff]
        %v1052 = vld [vmem:[%s329 + $0xe8] sm:$0xff]
        %v1053 = vld [vmem:[%s329 + $0xf0] sm:$0xff]
        %v1054 = vld [vmem:[%s329 + $0xf8] sm:$0xff]
        %v1055 = vld [vmem:[%s329 + $0x100] sm:$0xff]
        %v1056 = vld [vmem:[%s329 + $0x108] sm:$0xff]
        %v1057 = vld [vmem:[%s329 + $0x110] sm:$0xff]
        %v1058 = vld [vmem:[%s329 + $0x118] sm:$0xff]
        %v1059 = vld [vmem:[%s329 + $0x120] sm:$0xff]
        %v1060 = vld [vmem:[%s329 + $0x128] sm:$0xff]
        %v1061 = vld [vmem:[%s329 + $0x130] sm:$0xff]
        %v1062 = vld [vmem:[%s329 + $0x138] sm:$0xff]
        %v1063 = vld [vmem:[%s329 + $0x140] sm:$0xff]
        %v1064 = vld [vmem:[%s329 + $0x148] sm:$0xff]
        %v1065 = vld [vmem:[%s329 + $0x150] sm:$0xff]
        %v1066 = vld [vmem:[%s329 + $0x158] sm:$0xff]
        %v1067 = vld [vmem:[%s329 + $0x160] sm:$0xff]
        %v1068 = vld [vmem:[%s329 + $0x168] sm:$0xff]
        %v1069 = vld [vmem:[%s329 + $0x170] sm:$0xff]
        %v1070 = vld [vmem:[%s329 + $0x178] sm:$0xff]
        %v1071 = vld [vmem:[%s329 + $0x180] sm:$0xff]
        %v1072 = vld [vmem:[%s329 + $0x188] sm:$0xff]
        %v1073 = vld [vmem:[%s329 + $0x190] sm:$0xff]
        %v1074 = vld [vmem:[%s329 + $0x198] sm:$0xff]
        %v1075 = vld [vmem:[%s329 + $0x1a0] sm:$0xff]
        %v1076 = vld [vmem:[%s329 + $0x1a8] sm:$0xff]
        %v1077 = vld [vmem:[%s329 + $0x1b0] sm:$0xff]
        %v1078 = vld [vmem:[%s329 + $0x1b8] sm:$0xff]
        %v1079 = vld [vmem:[%s329 + $0x1c0] sm:$0xff]
        %v1080 = vld [vmem:[%s329 + $0x1c8] sm:$0xff]
        %v1081 = vld [vmem:[%s329 + $0x1d0] sm:$0xff]
        %v1082 = vld [vmem:[%s329 + $0x1d8] sm:$0xff]
        %v1083 = vld [vmem:[%s329 + $0x1e0] sm:$0xff]
        %v1084 = vld [vmem:[%s329 + $0x1e8] sm:$0xff]
        %v1085 = vld [vmem:[%s329 + $0x1f0] sm:$0xff]
        %v1086 = vld [vmem:[%s329 + $0x1f8] sm:$0xff]
        %v1087 = vld [vmem:[%s329 + $0x200] sm:$0xff]
        %v1088 = vld [vmem:[%s329 + $0x208] sm:$0xff]
        %v1089 = vld [vmem:[%s329 + $0x210] sm:$0xff]
        %v1090 = vld [vmem:[%s329 + $0x218] sm:$0xff]
        %v1091 = vld [vmem:[%s329 + $0x220] sm:$0xff]
        %v1092 = vld [vmem:[%s329 + $0x228] sm:$0xff]
        %v1093 = vld [vmem:[%s329 + $0x230] sm:$0xff]
        %v1094 = vld [vmem:[%s329 + $0x238] sm:$0xff]
        %1095 = vset.pattern.permute.xlu0 7
        %1096 = vperm.xlu0 %1095, %v433
        %v1097 = vpop.permute.xlu0 %1096
        %1099 = vset.pattern.permute.xlu0 7
        %1100 = vperm.xlu0 %1099, %v434
        %v1101 = vpop.permute.xlu0 %1100
        %1103 = vset.pattern.permute.xlu0 7
        %1104 = vperm.xlu0 %1103, %v435
        %v1105 = vpop.permute.xlu0 %1104
        %1107 = vset.pattern.permute.xlu0 7
        %1108 = vperm.xlu0 %1107, %v436
        %v1109 = vpop.permute.xlu0 %1108
        %v1112 = vsel %vm542, %v1013, 0
        %v1115 = vsel %vm542, %v1016, 0
        %v1118 = vsel %vm542, %v1019, 0
        %v1121 = vsel %vm542, %v1022, 0
        %1123 = vmatprep.subr.mxu0 %v1024
        %1124 = vmatpush1.msra.mxu0 %v1023
        %1125 = vmatprep.subr.mxu0 %v1026
        %1126 = vmatpush1.msra.mxu0 %v1025
        %1127 = vmatprep.subr.mxu0 %v1028
        %1128 = vmatpush1.msra.mxu0 %v1027
        %1129 = vmatprep.subr.mxu0 %v1030
        %1130 = vmatpush1.msra.mxu0 %v1029
        %1131 = vmatprep.subr.mxu0 %v1032
        %1132 = vmatpush1.msra.mxu0 %v1031
        %1133 = vmatprep.subr.mxu0 %v1034
        %1134 = vmatpush1.msra.mxu0 %v1033
        %1135 = vmatprep.subr.mxu0 %v1036
        %1136 = vmatpush1.msra.mxu0 %v1035
        %1137 = vmatprep.subr.mxu0 %v1038
        %1138 = vmatpush1.msra.mxu0 %v1037
        %1139 = vmatprep.subr.mxu0 %v1040
        %1140 = vmatpush1.msra.mxu0 %v1039
        %1141 = vmatprep.subr.mxu0 %v1042
        %1142 = vmatpush1.msra.mxu0 %v1041
        %1143 = vmatprep.subr.mxu0 %v1044
        %1144 = vmatpush1.msra.mxu0 %v1043
        %1145 = vmatprep.subr.mxu0 %v1046
        %1146 = vmatpush1.msra.mxu0 %v1045
        %1147 = vmatprep.subr.mxu0 %v1048
        %1148 = vmatpush1.msra.mxu0 %v1047
        %1149 = vmatprep.subr.mxu0 %v1050
        %1150 = vmatpush1.msra.mxu0 %v1049
        %1151 = vmatprep.subr.mxu0 %v1052
        %1152 = vmatpush1.msra.mxu0 %v1051
        %1153 = vmatprep.subr.mxu0 %v1054
        %1154 = vmatpush1.msra.mxu0 %v1053
        %1155 = vmatprep.subr.mxu0 %v1056
        %1156 = vmatpush1.msra.mxu0 %v1055
        %1157 = vmatprep.subr.mxu0 %v1058
        %1158 = vmatpush1.msra.mxu0 %v1057
        %1159 = vmatprep.subr.mxu0 %v1060
        %1160 = vmatpush1.msra.mxu0 %v1059
        %1161 = vmatprep.subr.mxu0 %v1062
        %1162 = vmatpush1.msra.mxu0 %v1061
        %1163 = vmatprep.subr.mxu0 %v1064
        %1164 = vmatpush1.msra.mxu0 %v1063
        %1165 = vmatprep.subr.mxu0 %v1066
        %1166 = vmatpush1.msra.mxu0 %v1065
        %1167 = vmatprep.subr.mxu0 %v1068
        %1168 = vmatpush1.msra.mxu0 %v1067
        %1169 = vmatprep.subr.mxu0 %v1070
        %1170 = vmatpush1.msra.mxu0 %v1069
        %1171 = vmatprep.subr.mxu0 %v1072
        %1172 = vmatpush1.msra.mxu0 %v1071
        %1173 = vmatprep.subr.mxu0 %v1074
        %1174 = vmatpush1.msra.mxu0 %v1073
        %1175 = vmatprep.subr.mxu0 %v1076
        %1176 = vmatpush1.msra.mxu0 %v1075
        %1177 = vmatprep.subr.mxu0 %v1078
        %1178 = vmatpush1.msra.mxu0 %v1077
        %1179 = vmatprep.subr.mxu0 %v1080
        %1180 = vmatpush1.msra.mxu0 %v1079
        %1181 = vmatprep.subr.mxu0 %v1082
        %1182 = vmatpush1.msra.mxu0 %v1081
        %1183 = vmatprep.subr.mxu0 %v1084
        %1184 = vmatpush1.msra.mxu0 %v1083
        %1185 = vmatprep.subr.mxu0 %v1086
        %1186 = vmatpush1.msra.mxu0 %v1085
        %1187 = vmatprep.mubr.f32.mxu0 %v1012
        %1188 = vmatmul.mubr.f32.gmra.mrb[0].mxu0 %v1011
        %v1189 = vpop.f32.mrb[0].mxu0
        %v1190 = vadd.f32 %v1097, %v1189
        %v1191 = vpop.f32.mrb[0].mxu0
        %v1192 = vadd.f32 %v1097, %v1191
        %1193 = vmatprep.mubr.f32.mxu0 %v1015
        %1194 = vmatmul.mubr.f32.gmra.mrb[0].mxu0 %v1014
        %v1195 = vpop.f32.mrb[0].mxu0
        %v1196 = vadd.f32 %v1101, %v1195
        %v1197 = vpop.f32.mrb[0].mxu0
        %v1198 = vadd.f32 %v1101, %v1197
        %1199 = vmatprep.mubr.f32.mxu0 %v1018
        %1200 = vmatmul.mubr.f32.gmra.mrb[0].mxu0 %v1017
        %v1201 = vpop.f32.mrb[0].mxu0
        %v1202 = vadd.f32 %v1105, %v1201
        %v1203 = vpop.f32.mrb[0].mxu0
        %v1204 = vadd.f32 %v1105, %v1203
        %1205 = vmatprep.mubr.f32.mxu0 %v1021
        %1206 = vmatmul.mubr.f32.gmra.mrb[0].mxu0 %v1020
        %v1207 = vpop.f32.mrb[0].mxu0
        %v1208 = vadd.f32 %v1109, %v1207
        %v1209 = vpop.f32.mrb[0].mxu0
        %v1210 = vadd.f32 %v1109, %v1209
        %1211 = vdwg.mxu0
        %1212 = vmatprep.subr.mxu0 %v1088
        %1213 = vmatpush1.msra.mxu0 %v1087
        %1214 = vmatprep.subr.mxu0 %v1090
        %1215 = vmatpush1.msra.mxu0 %v1089
        %1216 = vmatprep.subr.mxu0 %v1092
        %1217 = vmatpush1.msra.mxu0 %v1091
        %1218 = vmatprep.subr.mxu0 %v1094
        %1219 = vmatpush1.msra.mxu0 %v1093
        %1220 = vmatprep.subr.mxu0 0.0
        %1221 = vmatpush1.msra.mxu0 0.0
        %1222 = vmatprep.subr.mxu0 0.0
        %1223 = vmatpush1.msra.mxu0 0.0
        %1224 = vmatprep.subr.mxu0 0.0
        %1225 = vmatpush1.msra.mxu0 0.0
        %1226 = vmatprep.subr.mxu0 0.0
        %1227 = vmatpush1.msra.mxu0 0.0
        %1228 = vmatprep.subr.mxu0 0.0
        %1229 = vmatpush1.msra.mxu0 0.0
        %1230 = vmatprep.subr.mxu0 0.0
        %1231 = vmatpush1.msra.mxu0 0.0
        %1232 = vmatprep.subr.mxu0 0.0
        %1233 = vmatpush1.msra.mxu0 0.0
        %1234 = vmatprep.subr.mxu0 0.0
        %1235 = vmatpush1.msra.mxu0 0.0
        %1236 = vmatprep.subr.mxu0 0.0
        %1237 = vmatpush1.msra.mxu0 0.0
        %1238 = vmatprep.subr.mxu0 0.0
        %1239 = vmatpush1.msra.mxu0 0.0
        %1240 = vmatprep.subr.mxu0 0.0
        %1241 = vmatpush1.msra.mxu0 0.0
        %1242 = vmatprep.subr.mxu0 0.0
        %1243 = vmatpush1.msra.mxu0 0.0
        %1244 = vmatprep.subr.mxu0 0.0
        %1245 = vmatpush1.msra.mxu0 0.0
        %1246 = vmatprep.subr.mxu0 0.0
        %1247 = vmatpush1.msra.mxu0 0.0
        %1248 = vmatprep.subr.mxu0 0.0
        %1249 = vmatpush1.msra.mxu0 0.0
        %1250 = vmatprep.subr.mxu0 0.0
        %1251 = vmatpush1.msra.mxu0 0.0
        %1252 = vmatprep.subr.mxu0 0.0
        %1253 = vmatpush1.msra.mxu0 0.0
        %1254 = vmatprep.subr.mxu0 0.0
        %1255 = vmatpush1.msra.mxu0 0.0
        %1256 = vmatprep.subr.mxu0 0.0
        %1257 = vmatpush1.msra.mxu0 0.0
        %1258 = vmatprep.subr.mxu0 0.0
        %1259 = vmatpush1.msra.mxu0 0.0
        %1260 = vmatprep.subr.mxu0 0.0
        %1261 = vmatpush1.msra.mxu0 0.0
        %1262 = vmatprep.subr.mxu0 0.0
        %1263 = vmatpush1.msra.mxu0 0.0
        %1264 = vmatprep.subr.mxu0 0.0
        %1265 = vmatpush1.msra.mxu0 0.0
        %1266 = vmatprep.subr.mxu0 0.0
        %1267 = vmatpush1.msra.mxu0 0.0
        %1268 = vmatprep.subr.mxu0 0.0
        %1269 = vmatpush1.msra.mxu0 0.0
        %1270 = vmatprep.subr.mxu0 0.0
        %1271 = vmatpush1.msra.mxu0 0.0
        %1272 = vmatprep.subr.mxu0 0.0
        %1273 = vmatpush1.msra.mxu0 0.0
        %1274 = vmatprep.subr.mxu0 0.0
        %1275 = vmatpush1.msra.mxu0 0.0
        %1276 = vmatprep.mubr.f32.mxu0 0.0
        %1277 = vmatmul.mubr.f32.gmra.mrb[0].mxu0 %v1112
        %v1278 = vpop.f32.mrb[0].mxu0
        %v1279 = vadd.f32 %v1190, %v1278
        %v1280 = vpop.f32.mrb[0].mxu0
        %v1281 = vadd.f32 %v1192, %v1280
        %1282 = vmatprep.mubr.f32.mxu0 0.0
        %1283 = vmatmul.mubr.f32.gmra.mrb[0].mxu0 %v1115
        %v1284 = vpop.f32.mrb[0].mxu0
        %v1285 = vadd.f32 %v1196, %v1284
        %v1286 = vpop.f32.mrb[0].mxu0
        %v1287 = vadd.f32 %v1198, %v1286
        %1288 = vmatprep.mubr.f32.mxu0 0.0
        %1289 = vmatmul.mubr.f32.gmra.mrb[0].mxu0 %v1118
        %v1290 = vpop.f32.mrb[0].mxu0
        %v1291 = vadd.f32 %v1202, %v1290
        %v1292 = vpop.f32.mrb[0].mxu0
        %v1293 = vadd.f32 %v1204, %v1292
        %1294 = vmatprep.mubr.f32.mxu0 0.0
        %1295 = vmatmul.mubr.f32.gmra.mrb[0].mxu0 %v1121
        %v1296 = vpop.f32.mrb[0].mxu0
        %v1297 = vadd.f32 %v1208, %v1296
        %v1298 = vpop.f32.mrb[0].mxu0
        %v1299 = vadd.f32 %v1210, %v1298
        %1300 = vdwg.mxu0
        %v1301 = vadd.f32 %v1003, %v1004
        %1302 = vadd.xlane.f32.xlu0 %v1301
        %v1303 = vpop.xlane.xlu0 %1302
        %v1304 = vadd.f32 %v1005, %v1006
        %1305 = vadd.xlane.f32.xlu0 %v1304
        %v1306 = vpop.xlane.xlu0 %1305
        %v1307 = vadd.f32 %v1007, %v1008
        %1308 = vadd.xlane.f32.xlu0 %v1307
        %v1309 = vpop.xlane.xlu0 %1308
        %v1310 = vadd.f32 %v1009, %v1010
        %1311 = vadd.xlane.f32.xlu0 %v1310
        %v1312 = vpop.xlane.xlu0 %1311
        %v1313 = vmul.f32 %v1303, %v910
        %v1314 = vmul.f32 %v1306, %v910
        %v1315 = vmul.f32 %v1309, %v910
        %v1316 = vmul.f32 %v1312, %v910
        %v1317 = vmul.f32 %v1313, %v433
        %v1318 = vmul.f32 %v1314, %v434
        %v1319 = vmul.f32 %v1315, %v435
        %v1320 = vmul.f32 %v1316, %v436
        %v1322 = vsel %vm542, %v431, 0
        %1324 = vmatprep.subr.mxu0 0.0
        %1325 = vmatpush1.msra.mxu0 %v1317
        %1326 = vmatprep.subr.mxu0 0.0
        %1327 = vmatpush1.msra.mxu0 %v1318
        %1328 = vmatprep.subr.mxu0 0.0
        %1329 = vmatpush1.msra.mxu0 %v1319
        %1330 = vmatprep.subr.mxu0 0.0
        %1331 = vmatpush1.msra.mxu0 %v1320
        %1332 = vmatprep.subr.mxu0 0.0
        %1333 = vmatpush1.msra.mxu0 0.0
        %1334 = vmatprep.subr.mxu0 0.0
        %1335 = vmatpush1.msra.mxu0 0.0
        %1336 = vmatprep.subr.mxu0 0.0
        %1337 = vmatpush1.msra.mxu0 0.0
        %1338 = vmatprep.subr.mxu0 0.0
        %1339 = vmatpush1.msra.mxu0 0.0
        %1340 = vmatprep.subr.mxu0 0.0
        %1341 = vmatpush1.msra.mxu0 0.0
        %1342 = vmatprep.subr.mxu0 0.0
        %1343 = vmatpush1.msra.mxu0 0.0
        %1344 = vmatprep.subr.mxu0 0.0
        %1345 = vmatpush1.msra.mxu0 0.0
        %1346 = vmatprep.subr.mxu0 0.0
        %1347 = vmatpush1.msra.mxu0 0.0
        %1348 = vmatprep.subr.mxu0 0.0
        %1349 = vmatpush1.msra.mxu0 0.0
        %1350 = vmatprep.subr.mxu0 0.0
        %1351 = vmatpush1.msra.mxu0 0.0
        %1352 = vmatprep.subr.mxu0 0.0
        %1353 = vmatpush1.msra.mxu0 0.0
        %1354 = vmatprep.subr.mxu0 0.0
        %1355 = vmatpush1.msra.mxu0 0.0
        %1356 = vmatprep.subr.mxu0 0.0
        %1357 = vmatpush1.msra.mxu0 0.0
        %1358 = vmatprep.subr.mxu0 0.0
        %1359 = vmatpush1.msra.mxu0 0.0
        %1360 = vmatprep.subr.mxu0 0.0
        %1361 = vmatpush1.msra.mxu0 0.0
        %1362 = vmatprep.subr.mxu0 0.0
        %1363 = vmatpush1.msra.mxu0 0.0
        %1364 = vmatprep.subr.mxu0 0.0
        %1365 = vmatpush1.msra.mxu0 0.0
        %1366 = vmatprep.subr.mxu0 0.0
        %1367 = vmatpush1.msra.mxu0 0.0
        %1368 = vmatprep.subr.mxu0 0.0
        %1369 = vmatpush1.msra.mxu0 0.0
        %1370 = vmatprep.subr.mxu0 0.0
        %1371 = vmatpush1.msra.mxu0 0.0
        %1372 = vmatprep.subr.mxu0 0.0
        %1373 = vmatpush1.msra.mxu0 0.0
        %1374 = vmatprep.subr.mxu0 0.0
        %1375 = vmatpush1.msra.mxu0 0.0
        %1376 = vmatprep.subr.mxu0 0.0
        %1377 = vmatpush1.msra.mxu0 0.0
        %1378 = vmatprep.subr.mxu0 0.0
        %1379 = vmatpush1.msra.mxu0 0.0
        %1380 = vmatprep.subr.mxu0 0.0
        %1381 = vmatpush1.msra.mxu0 0.0
        %1382 = vmatprep.subr.mxu0 0.0
        %1383 = vmatpush1.msra.mxu0 0.0
        %1384 = vmatprep.subr.mxu0 0.0
        %1385 = vmatpush1.msra.mxu0 0.0
        %1386 = vmatprep.subr.mxu0 0.0
        %1387 = vmatpush1.msra.mxu0 0.0
        %1388 = vmatprep.mubr.f32.mxu0 0.0
        %1389 = vmatmul.mubr.f32.gmra.mrb[0].mxu0 %v1322
        %v1390 = vpop.f32.mrb[0].mxu0
        %v1391 = vadd.f32 0.0, %v1390
        %v1392 = vpop.f32.mrb[0].mxu0
        %1393 = vdwg.mxu0
        %vm1394 = vcmask 31744
        %v1395 = vsel %vm1394, %v1391, -inf
        %1396 = vmax.xlane.f32.xlu0 %v1395
        %v1397 = vpop.xlane.xlu0 %1396
        %v1398 = vsub.f32 %v1391, %v1397
        %v1399 = vmul.f32 %v1398, 1.442695
        %v1400 = vpow.pop %v1399
        %v1401 = vsel %vm1394, %v1400, 0.0
        %1402 = vadd.xlane.f32.xlu0 %v1401
        %v1403 = vpop.xlane.xlu0 %1402
        %v1404 = vrcp.pop %v1403
        %v1405 = vmul.f32 %v1400, %v1404
        %v1407 = vsel %vm1394, %v1405, 0
        %vm1409 = vcmask 1043456
        %v1411 = vsel %vm1409, %v432, 0
        %1413 = vmatprep.subr.mxu0 0.0
        %1414 = vmatpush1.msra.mxu0 %v1411
        %1415 = vmatprep.subr.mxu0 0.0
        %1416 = vmatpush1.msra.mxu0 0.0
        %1417 = vmatprep.subr.mxu0 0.0
        %1418 = vmatpush1.msra.mxu0 0.0
        %1419 = vmatprep.subr.mxu0 0.0
        %1420 = vmatpush1.msra.mxu0 0.0
        %1421 = vmatprep.subr.mxu0 0.0
        %1422 = vmatpush1.msra.mxu0 0.0
        %1423 = vmatprep.subr.mxu0 0.0
        %1424 = vmatpush1.msra.mxu0 0.0
        %1425 = vmatprep.subr.mxu0 0.0
        %1426 = vmatpush1.msra.mxu0 0.0
        %1427 = vmatprep.subr.mxu0 0.0
        %1428 = vmatpush1.msra.mxu0 0.0
        %1429 = vmatprep.subr.mxu0 0.0
        %1430 = vmatpush1.msra.mxu0 0.0
        %1431 = vmatprep.subr.mxu0 0.0
        %1432 = vmatpush1.msra.mxu0 0.0
        %1433 = vmatprep.subr.mxu0 0.0
        %1434 = vmatpush1.msra.mxu0 0.0
        %1435 = vmatprep.subr.mxu0 0.0
        %1436 = vmatpush1.msra.mxu0 0.0
        %1437 = vmatprep.subr.mxu0 0.0
        %1438 = vmatpush1.msra.mxu0 0.0
        %1439 = vmatprep.subr.mxu0 0.0
        %1440 = vmatpush1.msra.mxu0 0.0
        %1441 = vmatprep.subr.mxu0 0.0
        %1442 = vmatpush1.msra.mxu0 0.0
        %1443 = vmatprep.subr.mxu0 0.0
        %1444 = vmatpush1.msra.mxu0 0.0
        %1445 = vmatprep.subr.mxu0 0.0
        %1446 = vmatpush1.msra.mxu0 0.0
        %1447 = vmatprep.subr.mxu0 0.0
        %1448 = vmatpush1.msra.mxu0 0.0
        %1449 = vmatprep.subr.mxu0 0.0
        %1450 = vmatpush1.msra.mxu0 0.0
        %1451 = vmatprep.subr.mxu0 0.0
        %1452 = vmatpush1.msra.mxu0 0.0
        %1453 = vmatprep.subr.mxu0 0.0
        %1454 = vmatpush1.msra.mxu0 0.0
        %1455 = vmatprep.subr.mxu0 0.0
        %1456 = vmatpush1.msra.mxu0 0.0
        %1457 = vmatprep.subr.mxu0 0.0
        %1458 = vmatpush1.msra.mxu0 0.0
        %1459 = vmatprep.subr.mxu0 0.0
        %1460 = vmatpush1.msra.mxu0 0.0
        %1461 = vmatprep.subr.mxu0 0.0
        %1462 = vmatpush1.msra.mxu0 0.0
        %1463 = vmatprep.subr.mxu0 0.0
        %1464 = vmatpush1.msra.mxu0 0.0
        %1465 = vmatprep.subr.mxu0 0.0
        %1466 = vmatpush1.msra.mxu0 0.0
        %1467 = vmatprep.subr.mxu0 0.0
        %1468 = vmatpush1.msra.mxu0 0.0
        %1469 = vmatprep.subr.mxu0 0.0
        %1470 = vmatpush1.msra.mxu0 0.0
        %1471 = vmatprep.subr.mxu0 0.0
        %1472 = vmatpush1.msra.mxu0 0.0
        %1473 = vmatprep.subr.mxu0 0.0
        %1474 = vmatpush1.msra.mxu0 0.0
        %1475 = vmatprep.subr.mxu0 0.0
        %1476 = vmatpush1.msra.mxu0 0.0
        %1477 = vmatprep.mubr.f32.mxu0 0.0
        %1478 = vmatmul.mubr.f32.gmra.mrb[0].mxu0 %v1407
        %v1479 = vpop.f32.mrb[0].mxu0
        %v1480 = vadd.f32 0.0, %v1479
        %v1481 = vpop.f32.mrb[0].mxu0
        %1482 = vdwg.mxu0
        %v1483 = vmul.f32 %v431, %v1480
        %v1484 = vadd.f32 %v1279, %v1281
        %1485 = vadd.xlane.f32.xlu0 %v1484
        %v1486 = vpop.xlane.xlu0 %1485
        %v1487 = vadd.f32 %v1285, %v1287
        %1488 = vadd.xlane.f32.xlu0 %v1487
        %v1489 = vpop.xlane.xlu0 %1488
        %v1490 = vadd.f32 %v1291, %v1293
        %1491 = vadd.xlane.f32.xlu0 %v1490
        %v1492 = vpop.xlane.xlu0 %1491
        %v1493 = vadd.f32 %v1297, %v1299
        %1494 = vadd.xlane.f32.xlu0 %v1493
        %v1495 = vpop.xlane.xlu0 %1494
        %v1496 = vmul.f32 %v1486, %v910
        %v1497 = vmul.f32 %v1489, %v910
        %v1498 = vmul.f32 %v1492, %v910
        %v1499 = vmul.f32 %v1495, %v910
        %v1500 = vmul.f32 %v1496, %v433
        %v1501 = vmul.f32 %v1497, %v434
        %v1502 = vmul.f32 %v1498, %v435
        %v1503 = vmul.f32 %v1499, %v436
        %1504 = vmatprep.subr.mxu0 0.0
        %1505 = vmatpush1.msra.mxu0 %v1500
        %1506 = vmatprep.subr.mxu0 0.0
        %1507 = vmatpush1.msra.mxu0 %v1501
        %1508 = vmatprep.subr.mxu0 0.0
        %1509 = vmatpush1.msra.mxu0 %v1502
        %1510 = vmatprep.subr.mxu0 0.0
        %1511 = vmatpush1.msra.mxu0 %v1503
        %1512 = vmatprep.subr.mxu0 0.0
        %1513 = vmatpush1.msra.mxu0 0.0
        %1514 = vmatprep.subr.mxu0 0.0
        %1515 = vmatpush1.msra.mxu0 0.0
        %1516 = vmatprep.subr.mxu0 0.0
        %1517 = vmatpush1.msra.mxu0 0.0
        %1518 = vmatprep.subr.mxu0 0.0
        %1519 = vmatpush1.msra.mxu0 0.0
        %1520 = vmatprep.subr.mxu0 0.0
        %1521 = vmatpush1.msra.mxu0 0.0
        %1522 = vmatprep.subr.mxu0 0.0
        %1523 = vmatpush1.msra.mxu0 0.0
        %1524 = vmatprep.subr.mxu0 0.0
        %1525 = vmatpush1.msra.mxu0 0.0
        %1526 = vmatprep.subr.mxu0 0.0
        %1527 = vmatpush1.msra.mxu0 0.0
        %1528 = vmatprep.subr.mxu0 0.0
        %1529 = vmatpush1.msra.mxu0 0.0
        %1530 = vmatprep.subr.mxu0 0.0
        %1531 = vmatpush1.msra.mxu0 0.0
        %1532 = vmatprep.subr.mxu0 0.0
        %1533 = vmatpush1.msra.mxu0 0.0
        %1534 = vmatprep.subr.mxu0 0.0
        %1535 = vmatpush1.msra.mxu0 0.0
        %1536 = vmatprep.subr.mxu0 0.0
        %1537 = vmatpush1.msra.mxu0 0.0
        %1538 = vmatprep.subr.mxu0 0.0
        %1539 = vmatpush1.msra.mxu0 0.0
        %1540 = vmatprep.subr.mxu0 0.0
        %1541 = vmatpush1.msra.mxu0 0.0
        %1542 = vmatprep.subr.mxu0 0.0
        %1543 = vmatpush1.msra.mxu0 0.0
        %1544 = vmatprep.subr.mxu0 0.0
        %1545 = vmatpush1.msra.mxu0 0.0
        %1546 = vmatprep.subr.mxu0 0.0
        %1547 = vmatpush1.msra.mxu0 0.0
        %1548 = vmatprep.subr.mxu0 0.0
        %1549 = vmatpush1.msra.mxu0 0.0
        %1550 = vmatprep.subr.mxu0 0.0
        %1551 = vmatpush1.msra.mxu0 0.0
        %1552 = vmatprep.subr.mxu0 0.0
        %1553 = vmatpush1.msra.mxu0 0.0
        %1554 = vmatprep.subr.mxu0 0.0
        %1555 = vmatpush1.msra.mxu0 0.0
        %1556 = vmatprep.subr.mxu0 0.0
        %1557 = vmatpush1.msra.mxu0 0.0
        %1558 = vmatprep.subr.mxu0 0.0
        %1559 = vmatpush1.msra.mxu0 0.0
        %1560 = vmatprep.subr.mxu0 0.0
        %1561 = vmatpush1.msra.mxu0 0.0
        %1562 = vmatprep.subr.mxu0 0.0
        %1563 = vmatpush1.msra.mxu0 0.0
        %1564 = vmatprep.subr.mxu0 0.0
        %1565 = vmatpush1.msra.mxu0 0.0
        %1566 = vmatprep.subr.mxu0 0.0
        %1567 = vmatpush1.msra.mxu0 0.0
        %1568 = vmatprep.mubr.f32.mxu0 0.0
        %1569 = vmatmul.mubr.f32.gmra.mrb[0].mxu0 %v1322
        %v1570 = vpop.f32.mrb[0].mxu0
        %v1571 = vadd.f32 0.0, %v1570
        %v1572 = vpop.f32.mrb[0].mxu0
        %1573 = vdwg.mxu0
        %v1574 = vsel %vm1394, %v1571, -inf
        %1575 = vmax.xlane.f32.xlu0 %v1574
        %v1576 = vpop.xlane.xlu0 %1575
        %v1577 = vsub.f32 %v1571, %v1576
        %v1578 = vmul.f32 %v1577, 1.442695
        %v1579 = vpow.pop %v1578
        %v1580 = vsel %vm1394, %v1579, 0.0
        %1581 = vadd.xlane.f32.xlu0 %v1580
        %v1582 = vpop.xlane.xlu0 %1581
        %v1583 = vrcp.pop %v1582
        %v1584 = vmul.f32 %v1579, %v1583
        %v1586 = vsel %vm1394, %v1584, 0
        %1588 = vmatprep.subr.mxu0 0.0
        %1589 = vmatpush1.msra.mxu0 %v1411
        %1590 = vmatprep.subr.mxu0 0.0
        %1591 = vmatpush1.msra.mxu0 0.0
        %1592 = vmatprep.subr.mxu0 0.0
        %1593 = vmatpush1.msra.mxu0 0.0
        %1594 = vmatprep.subr.mxu0 0.0
        %1595 = vmatpush1.msra.mxu0 0.0
        %1596 = vmatprep.subr.mxu0 0.0
        %1597 = vmatpush1.msra.mxu0 0.0
        %1598 = vmatprep.subr.mxu0 0.0
        %1599 = vmatpush1.msra.mxu0 0.0
        %1600 = vmatprep.subr.mxu0 0.0
        %1601 = vmatpush1.msra.mxu0 0.0
        %1602 = vmatprep.subr.mxu0 0.0
        %1603 = vmatpush1.msra.mxu0 0.0
        %1604 = vmatprep.subr.mxu0 0.0
        %1605 = vmatpush1.msra.mxu0 0.0
        %1606 = vmatprep.subr.mxu0 0.0
        %1607 = vmatpush1.msra.mxu0 0.0
        %1608 = vmatprep.subr.mxu0 0.0
        %1609 = vmatpush1.msra.mxu0 0.0
        %1610 = vmatprep.subr.mxu0 0.0
        %1611 = vmatpush1.msra.mxu0 0.0
        %1612 = vmatprep.subr.mxu0 0.0
        %1613 = vmatpush1.msra.mxu0 0.0
        %1614 = vmatprep.subr.mxu0 0.0
        %1615 = vmatpush1.msra.mxu0 0.0
        %1616 = vmatprep.subr.mxu0 0.0
        %1617 = vmatpush1.msra.mxu0 0.0
        %1618 = vmatprep.subr.mxu0 0.0
        %1619 = vmatpush1.msra.mxu0 0.0
        %1620 = vmatprep.subr.mxu0 0.0
        %1621 = vmatpush1.msra.mxu0 0.0
        %1622 = vmatprep.subr.mxu0 0.0
        %1623 = vmatpush1.msra.mxu0 0.0
        %1624 = vmatprep.subr.mxu0 0.0
        %1625 = vmatpush1.msra.mxu0 0.0
        %1626 = vmatprep.subr.mxu0 0.0
        %1627 = vmatpush1.msra.mxu0 0.0
        %1628 = vmatprep.subr.mxu0 0.0
        %1629 = vmatpush1.msra.mxu0 0.0
        %1630 = vmatprep.subr.mxu0 0.0
        %1631 = vmatpush1.msra.mxu0 0.0
        %1632 = vmatprep.subr.mxu0 0.0
        %1633 = vmatpush1.msra.mxu0 0.0
        %1634 = vmatprep.subr.mxu0 0.0
        %1635 = vmatpush1.msra.mxu0 0.0
        %1636 = vmatprep.subr.mxu0 0.0
        %1637 = vmatpush1.msra.mxu0 0.0
        %1638 = vmatprep.subr.mxu0 0.0
        %1639 = vmatpush1.msra.mxu0 0.0
        %1640 = vmatprep.subr.mxu0 0.0
        %1641 = vmatpush1.msra.mxu0 0.0
        %1642 = vmatprep.subr.mxu0 0.0
        %1643 = vmatpush1.msra.mxu0 0.0
        %1644 = vmatprep.subr.mxu0 0.0
        %1645 = vmatpush1.msra.mxu0 0.0
        %1646 = vmatprep.subr.mxu0 0.0
        %1647 = vmatpush1.msra.mxu0 0.0
        %1648 = vmatprep.subr.mxu0 0.0
        %1649 = vmatpush1.msra.mxu0 0.0
        %1650 = vmatprep.subr.mxu0 0.0
        %1651 = vmatpush1.msra.mxu0 0.0
        %1652 = vmatprep.mubr.f32.mxu0 0.0
        %1653 = vmatmul.mubr.f32.gmra.mrb[0].mxu0 %v1586
        %v1654 = vpop.f32.mrb[0].mxu0
        %v1655 = vadd.f32 0.0, %v1654
        %v1656 = vpop.f32.mrb[0].mxu0
        %1657 = vdwg.mxu0
        %v1658 = vmul.f32 %v431, %v1655
        %v1660 = vsel %vm542, %v1658, 0
        %1662 = vmatprep.subr.mxu0 %v1004
        %1663 = vmatpush1.msra.mxu0 %v1003
        %1664 = vmatprep.subr.mxu0 %v1006
        %1665 = vmatpush1.msra.mxu0 %v1005
        %1666 = vmatprep.subr.mxu0 %v1008
        %1667 = vmatpush1.msra.mxu0 %v1007
        %1668 = vmatprep.subr.mxu0 %v1010
        %1669 = vmatpush1.msra.mxu0 %v1009
        %1670 = vmatprep.subr.mxu0 0.0
        %1671 = vmatpush1.msra.mxu0 0.0
        %1672 = vmatprep.subr.mxu0 0.0
        %1673 = vmatpush1.msra.mxu0 0.0
        %1674 = vmatprep.subr.mxu0 0.0
        %1675 = vmatpush1.msra.mxu0 0.0
        %1676 = vmatprep.subr.mxu0 0.0
        %1677 = vmatpush1.msra.mxu0 0.0
        %1678 = vmatprep.subr.mxu0 0.0
        %1679 = vmatpush1.msra.mxu0 0.0
        %1680 = vmatprep.subr.mxu0 0.0
        %1681 = vmatpush1.msra.mxu0 0.0
        %1682 = vmatprep.subr.mxu0 0.0
        %1683 = vmatpush1.msra.mxu0 0.0
        %1684 = vmatprep.subr.mxu0 0.0
        %1685 = vmatpush1.msra.mxu0 0.0
        %1686 = vmatprep.subr.mxu0 0.0
        %1687 = vmatpush1.msra.mxu0 0.0
        %1688 = vmatprep.subr.mxu0 0.0
        %1689 = vmatpush1.msra.mxu0 0.0
        %1690 = vmatprep.subr.mxu0 0.0
        %1691 = vmatpush1.msra.mxu0 0.0
        %1692 = vmatprep.subr.mxu0 0.0
        %1693 = vmatpush1.msra.mxu0 0.0
        %1694 = vmatprep.subr.mxu0 0.0
        %1695 = vmatpush1.msra.mxu0 0.0
        %1696 = vmatprep.subr.mxu0 0.0
        %1697 = vmatpush1.msra.mxu0 0.0
        %1698 = vmatprep.subr.mxu0 0.0
        %1699 = vmatpush1.msra.mxu0 0.0
        %1700 = vmatprep.subr.mxu0 0.0
        %1701 = vmatpush1.msra.mxu0 0.0
        %1702 = vmatprep.subr.mxu0 0.0
        %1703 = vmatpush1.msra.mxu0 0.0
        %1704 = vmatprep.subr.mxu0 0.0
        %1705 = vmatpush1.msra.mxu0 0.0
        %1706 = vmatprep.subr.mxu0 0.0
        %1707 = vmatpush1.msra.mxu0 0.0
        %1708 = vmatprep.subr.mxu0 0.0
        %1709 = vmatpush1.msra.mxu0 0.0
        %1710 = vmatprep.subr.mxu0 0.0
        %1711 = vmatpush1.msra.mxu0 0.0
        %1712 = vmatprep.subr.mxu0 0.0
        %1713 = vmatpush1.msra.mxu0 0.0
        %1714 = vmatprep.subr.mxu0 0.0
        %1715 = vmatpush1.msra.mxu0 0.0
        %1716 = vmatprep.subr.mxu0 0.0
        %1717 = vmatpush1.msra.mxu0 0.0
        %1718 = vmatprep.subr.mxu0 0.0
        %1719 = vmatpush1.msra.mxu0 0.0
        %1720 = vmatprep.subr.mxu0 0.0
        %1721 = vmatpush1.msra.mxu0 0.0
        %1722 = vmatprep.subr.mxu0 0.0
        %1723 = vmatpush1.msra.mxu0 0.0
        %1724 = vmatprep.subr.mxu0 0.0
        %1725 = vmatpush1.msra.mxu0 0.0
        %1726 = vmatprep.mubr.f32.mxu0 0.0
        %1727 = vmatmul.mubr.f32.gmra.mrb[0].mxu0 %v1660
        %v1728 = vpop.f32.mrb[0].mxu0
        %v1729 = vadd.f32 0.0, %v1728
        %v1730 = vpop.f32.mrb[0].mxu0
        %v1731 = vadd.f32 0.0, %v1730
        %1732 = vdwg.mxu0
        %v1734 = vsel %vm542, %v1483, 0
        %1736 = vmatprep.subr.mxu0 %v1281
        %1737 = vmatpush1.msra.mxu0 %v1279
        %1738 = vmatprep.subr.mxu0 %v1287
        %1739 = vmatpush1.msra.mxu0 %v1285
        %1740 = vmatprep.subr.mxu0 %v1293
        %1741 = vmatpush1.msra.mxu0 %v1291
        %1742 = vmatprep.subr.mxu0 %v1299
        %1743 = vmatpush1.msra.mxu0 %v1297
        %1744 = vmatprep.subr.mxu0 0.0
        %1745 = vmatpush1.msra.mxu0 0.0
        %1746 = vmatprep.subr.mxu0 0.0
        %1747 = vmatpush1.msra.mxu0 0.0
        %1748 = vmatprep.subr.mxu0 0.0
        %1749 = vmatpush1.msra.mxu0 0.0
        %1750 = vmatprep.subr.mxu0 0.0
        %1751 = vmatpush1.msra.mxu0 0.0
        %1752 = vmatprep.subr.mxu0 0.0
        %1753 = vmatpush1.msra.mxu0 0.0
        %1754 = vmatprep.subr.mxu0 0.0
        %1755 = vmatpush1.msra.mxu0 0.0
        %1756 = vmatprep.subr.mxu0 0.0
        %1757 = vmatpush1.msra.mxu0 0.0
        %1758 = vmatprep.subr.mxu0 0.0
        %1759 = vmatpush1.msra.mxu0 0.0
        %1760 = vmatprep.subr.mxu0 0.0
        %1761 = vmatpush1.msra.mxu0 0.0
        %1762 = vmatprep.subr.mxu0 0.0
        %1763 = vmatpush1.msra.mxu0 0.0
        %1764 = vmatprep.subr.mxu0 0.0
        %1765 = vmatpush1.msra.mxu0 0.0
        %1766 = vmatprep.subr.mxu0 0.0
        %1767 = vmatpush1.msra.mxu0 0.0
        %1768 = vmatprep.subr.mxu0 0.0
        %1769 = vmatpush1.msra.mxu0 0.0
        %1770 = vmatprep.subr.mxu0 0.0
        %1771 = vmatpush1.msra.mxu0 0.0
        %1772 = vmatprep.subr.mxu0 0.0
        %1773 = vmatpush1.msra.mxu0 0.0
        %1774 = vmatprep.subr.mxu0 0.0
        %1775 = vmatpush1.msra.mxu0 0.0
        %1776 = vmatprep.subr.mxu0 0.0
        %1777 = vmatpush1.msra.mxu0 0.0
        %1778 = vmatprep.subr.mxu0 0.0
        %1779 = vmatpush1.msra.mxu0 0.0
        %1780 = vmatprep.subr.mxu0 0.0
        %1781 = vmatpush1.msra.mxu0 0.0
        %1782 = vmatprep.subr.mxu0 0.0
        %1783 = vmatpush1.msra.mxu0 0.0
        %1784 = vmatprep.subr.mxu0 0.0
        %1785 = vmatpush1.msra.mxu0 0.0
        %1786 = vmatprep.subr.mxu0 0.0
        %1787 = vmatpush1.msra.mxu0 0.0
        %1788 = vmatprep.subr.mxu0 0.0
        %1789 = vmatpush1.msra.mxu0 0.0
        %1790 = vmatprep.subr.mxu0 0.0
        %1791 = vmatpush1.msra.mxu0 0.0
        %1792 = vmatprep.subr.mxu0 0.0
        %1793 = vmatpush1.msra.mxu0 0.0
        %1794 = vmatprep.subr.mxu0 0.0
        %1795 = vmatpush1.msra.mxu0 0.0
        %1796 = vmatprep.subr.mxu0 0.0
        %1797 = vmatpush1.msra.mxu0 0.0
        %1798 = vmatprep.subr.mxu0 0.0
        %1799 = vmatpush1.msra.mxu0 0.0
        %1800 = vmatprep.mubr.f32.mxu0 0.0
        %1801 = vmatmul.mubr.f32.gmra.mrb[0].mxu0 %v1734
        %v1802 = vpop.f32.mrb[0].mxu0
        %v1803 = vadd.f32 %v1729, %v1802
        %v1804 = vpop.f32.mrb[0].mxu0
        %v1805 = vadd.f32 %v1731, %v1804
        %1806 = vdwg.mxu0
        %v1807 = vxor.u32 %v1803, 2147483648
        %v1808 = vxor.u32 %v1805, 2147483648
        %v1809 = vmul.f32 %v1807, 1.442695
        %v1810 = vpow.pop %v1809
        %v1811 = vmul.f32 %v1808, 1.442695
        %v1812 = vpow.pop %v1811
        %v1813 = vadd.f32 %v1810, 1.0
        %v1814 = vadd.f32 %v1812, 1.0
        %v1815 = vrcp.pop %v1813
        %v1816 = vmul.f32 1.0, %v1815
        %v1817 = vrcp.pop %v1814
        %v1818 = vmul.f32 1.0, %v1817
        %1819 = vrot.lane.b32.xlu0 %v433, 120
        %v1820 = vpop.permute.xlu0 %1819
        %1821 = vrot.lane.b32.xlu0 %v434, 120
        %v1822 = vpop.permute.xlu0 %1821
        %1823 = vrot.lane.b32.xlu0 %v435, 120
        %v1824 = vpop.permute.xlu0 %1823
        %1825 = vrot.lane.b32.xlu0 %v436, 120
        %v1826 = vpop.permute.xlu0 %1825
        %vm1827 = vcmask 64512
        %v1828 = vsel %vm1827, %v1820, 0
        %v1830 = vsel %vm1827, %v1822, 0
        %v1832 = vsel %vm1827, %v1824, 0
        %v1834 = vsel %vm1827, %v1826, 0
        %1836 = vmatprep.subr.mxu0 %v1818
        %1837 = vmatpush1.msra.mxu0 %v1816
        %1838 = vmatprep.subr.mxu0 0.0
        %1839 = vmatpush1.msra.mxu0 0.0
        %1840 = vmatprep.subr.mxu0 0.0
        %1841 = vmatpush1.msra.mxu0 0.0
        %1842 = vmatprep.subr.mxu0 0.0
        %1843 = vmatpush1.msra.mxu0 0.0
        %1844 = vmatprep.subr.mxu0 0.0
        %1845 = vmatpush1.msra.mxu0 0.0
        %1846 = vmatprep.subr.mxu0 0.0
        %1847 = vmatpush1.msra.mxu0 0.0
        %1848 = vmatprep.subr.mxu0 0.0
        %1849 = vmatpush1.msra.mxu0 0.0
        %1850 = vmatprep.subr.mxu0 0.0
        %1851 = vmatpush1.msra.mxu0 0.0
        %1852 = vmatprep.subr.mxu0 0.0
        %1853 = vmatpush1.msra.mxu0 0.0
        %1854 = vmatprep.subr.mxu0 0.0
        %1855 = vmatpush1.msra.mxu0 0.0
        %1856 = vmatprep.subr.mxu0 0.0
        %1857 = vmatpush1.msra.mxu0 0.0
        %1858 = vmatprep.subr.mxu0 0.0
        %1859 = vmatpush1.msra.mxu0 0.0
        %1860 = vmatprep.subr.mxu0 0.0
        %1861 = vmatpush1.msra.mxu0 0.0
        %1862 = vmatprep.subr.mxu0 0.0
        %1863 = vmatpush1.msra.mxu0 0.0
        %1864 = vmatprep.subr.mxu0 0.0
        %1865 = vmatpush1.msra.mxu0 0.0
        %1866 = vmatprep.subr.mxu0 0.0
        %1867 = vmatpush1.msra.mxu0 0.0
        %1868 = vmatprep.subr.mxu0 0.0
        %1869 = vmatpush1.msra.mxu0 0.0
        %1870 = vmatprep.subr.mxu0 0.0
        %1871 = vmatpush1.msra.mxu0 0.0
        %1872 = vmatprep.subr.mxu0 0.0
        %1873 = vmatpush1.msra.mxu0 0.0
        %1874 = vmatprep.subr.mxu0 0.0
        %1875 = vmatpush1.msra.mxu0 0.0
        %1876 = vmatprep.subr.mxu0 0.0
        %1877 = vmatpush1.msra.mxu0 0.0
        %1878 = vmatprep.subr.mxu0 0.0
        %1879 = vmatpush1.msra.mxu0 0.0
        %1880 = vmatprep.subr.mxu0 0.0
        %1881 = vmatpush1.msra.mxu0 0.0
        %1882 = vmatprep.subr.mxu0 0.0
        %1883 = vmatpush1.msra.mxu0 0.0
        %1884 = vmatprep.subr.mxu0 0.0
        %1885 = vmatpush1.msra.mxu0 0.0
        %1886 = vmatprep.subr.mxu0 0.0
        %1887 = vmatpush1.msra.mxu0 0.0
        %1888 = vmatprep.subr.mxu0 0.0
        %1889 = vmatpush1.msra.mxu0 0.0
        %1890 = vmatprep.subr.mxu0 0.0
        %1891 = vmatpush1.msra.mxu0 0.0
        %1892 = vmatprep.subr.mxu0 0.0
        %1893 = vmatpush1.msra.mxu0 0.0
        %1894 = vmatprep.subr.mxu0 0.0
        %1895 = vmatpush1.msra.mxu0 0.0
        %1896 = vmatprep.subr.mxu0 0.0
        %1897 = vmatpush1.msra.mxu0 0.0
        %1898 = vmatprep.subr.mxu0 0.0
        %1899 = vmatpush1.msra.mxu0 0.0
        %1900 = vmatprep.mubr.f32.mxu0 0.0
        %1901 = vmatmul.mubr.f32.gmra.mrb[0].mxu0 %v1828
        %v1902 = vpop.f32.mrb[0].mxu0
        %v1903 = vadd.f32 0.0, %v1902
        %v1904 = vpop.f32.mrb[0].mxu0
        %v1905 = vadd.f32 0.0, %v1904
        %1906 = vmatprep.mubr.f32.mxu0 0.0
        %1907 = vmatmul.mubr.f32.gmra.mrb[0].mxu0 %v1830
        %v1908 = vpop.f32.mrb[0].mxu0
        %v1909 = vadd.f32 0.0, %v1908
        %v1910 = vpop.f32.mrb[0].mxu0
        %v1911 = vadd.f32 0.0, %v1910
        %1912 = vmatprep.mubr.f32.mxu0 0.0
        %1913 = vmatmul.mubr.f32.gmra.mrb[0].mxu0 %v1832
        %v1914 = vpop.f32.mrb[0].mxu0
        %v1915 = vadd.f32 0.0, %v1914
        %v1916 = vpop.f32.mrb[0].mxu0
        %v1917 = vadd.f32 0.0, %v1916
        %1918 = vmatprep.mubr.f32.mxu0 0.0
        %1919 = vmatmul.mubr.f32.gmra.mrb[0].mxu0 %v1834
        %v1920 = vpop.f32.mrb[0].mxu0
        %v1921 = vadd.f32 0.0, %v1920
        %v1922 = vpop.f32.mrb[0].mxu0
        %v1923 = vadd.f32 0.0, %v1922
        %1924 = vdwg.mxu0
        %v1925 = vmul.f32 %v379, %v1903
        %v1926 = vmul.f32 %v380, %v1905
        %v1927 = vmul.f32 %v381, %v1909
        %v1928 = vmul.f32 %v382, %v1911
        %v1929 = vmul.f32 %v383, %v1915
        %v1930 = vmul.f32 %v384, %v1917
        %v1931 = vmul.f32 %v385, %v1921
        %v1932 = vmul.f32 %v386, %v1923
        %1933 = vst [vmem:[%s369] sm:$0xff] %v1925
        %1934 = vst [vmem:[%s369 + $0x8] sm:$0xff] %v1926
        %1935 = vst [vmem:[%s369 + $0x10] sm:$0xff] %v1927
        %1936 = vst [vmem:[%s369 + $0x18] sm:$0xff] %v1928
        %1937 = vst [vmem:[%s369 + $0x20] sm:$0xff] %v1929
        %1938 = vst [vmem:[%s369 + $0x28] sm:$0xff] %v1930
        %1939 = vst [vmem:[%s369 + $0x30] sm:$0xff] %v1931
        %1940 = vst [vmem:[%s369 + $0x38] sm:$0xff] %v1932
        %s1941 = sand.u32 %s233, 1
        %s1942 = scalar_lea.sflag [#allocation4], %s1941
        %s1943 = sand.u32 %s233, 1
        %s1944 = smul.addr %s1943, 64
        %s1945 = scalar_lea.vmem [#allocation5], %s1944
        // Predicated region
        $region61: #{tpu_custom_call.1} parent=55 // pred_check
          %p1946 = pneg %p243
        $region62: #{tpu_custom_call.1} parent=55 // pred_check_branch
          %1948 = sbr.rel (%p1946) target = $region64
        $region63: #{tpu_custom_call.1} parent=55 // pred_region
          %s1949 = smul.u32 4, %s26
          %s1951 = ssub.s32 1024, 1024
          %1952 = vsyncadd %s1942, %s1951
          %s1953 = smul.addr %s1949, 2
          %s1954 = smul.addr %s1953, 128
          %s1955 = scalar_lea.hbm %s9, %s1954
          %s1956 = sshll.u32 %s1945, 4
          %s1957 = int_to_ptr.vmem [resolvable:$true] %s1956
          %1962 = dma.vmem_to_hbm [thread:$0]  %s1957, 1024, %s1955, %s1942, 256, 256, 16
        $region64: #{tpu_custom_call.1} parent=55 // pred_fallthru
          _
      $region56: #{tpu_custom_call.1} parent=5 // pred_fallthru
        _
      %p1963 = scmp.le.s32.totalorder 2, %s21
      // Predicated region
      $region65: #{tpu_custom_call.1} parent=5 // pred_check
        %p1964 = pneg %p1963
      $region66: #{tpu_custom_call.1} parent=5 // pred_check_branch
        %1966 = sbr.rel (%p1964) target = $region68
      $region67: #{tpu_custom_call.1} parent=5 // pred_region
        %s1967 = ssub.s32 %s21, 2
        // Predicated region
        $region69: #{tpu_custom_call.1} parent=67 // pred_check
          %p1968 = pneg %p249
        $region70: #{tpu_custom_call.1} parent=67 // pred_check_branch
          %1970 = sbr.rel (%p1968) target = $region72
        $region71: #{tpu_custom_call.1} parent=67 // pred_region
          %s1971 = sand.u32 %s234, 1
          %s1972 = scalar_lea.sflag [#allocation4], %s1971
          %s1973 = sand.u32 %s234, 1
          %s1974 = smul.addr %s1973, 64
          %s1975 = scalar_lea.vmem [#allocation5], %s1974
          %1976 = dma.done %s1972, 1024
        $region72: #{tpu_custom_call.1} parent=67 // pred_fallthru
          _
      $region68: #{tpu_custom_call.1} parent=5 // pred_fallthru
        _
    $region6: #{tpu_custom_call.1} parent=1 // loop_footer
      %s25 = sadd.s32 1, %s21
    $region7: #{tpu_custom_call.1} parent=1 // loop_footer_branch
      %20 = sbr.rel target = $region3
    $region8: #{tpu_custom_call.1} parent=1 // loop_exit
      _
    %1977 = vsyncpa [#allocation3], 1
    %s1978 = scalar_lea.sflag [#allocation3], 1
    %1979 = vsyncpa %s1978, 1
    %1980 = vsyncpa [#allocation4], 1
    %s1981 = scalar_lea.sflag [#allocation4], 1
    %1982 = vsyncpa %s1981, 1

</llo_original>
